<compile_context>
chip_gen: v6e
topology: v6e:2x2x1
jax: 0.10.0
libtpu: 0.0.40
codegen_flags: <defaults>
</compile_context>

<pallas_src>
import functools

import jax
import jax.numpy as jnp
from jax.experimental import pallas as pl
from jax.experimental.pallas import tpu as pltpu


# ----------------------------- fused Pallas kernel ---------------------------
def _fused_autorec_kernel(x_ref, *refs, acts, compute_dtype, precision,
                          approx_sigmoid):
    """One row-tile of the full autoencoder:  x -> L1 -> act -> ... -> Ln -> act.

    refs = (w1, b1, w2, b2, ..., wn, bn, o_ref)
      x_ref: (TILE_B, F0) in compute_dtype     w_i: (Fin_i, Fout_i) compute_dtype
      b_i:   (1, Fout_i)  f32                  o_ref: (TILE_B, F_last)
    All intermediates stay in vregs/VMEM; only the final result is stored.
    """
    *wb_refs, o_ref = refs
    h = x_ref[...]
    for li, act in enumerate(acts):
        w_ref = wb_refs[2 * li]
        b_ref = wb_refs[2 * li + 1]
        # MXU matmul: operands in compute_dtype, accumulate in f32.
        lhs = h if h.dtype == compute_dtype else h.astype(compute_dtype)
        y = jnp.dot(lhs, w_ref[...],
                    preferred_element_type=jnp.float32, precision=precision)
        # Epilogue in f32: bias add + activation (VPU / EUP — free filler
        # while the MXU runs the next layer's matmul).
        y = y + b_ref[...]
        if act == "relu":
            h = jnp.maximum(y, 0.0)
        elif approx_sigmoid:
            # exp -> EUP, approx reciprocal -> EUP: keeps VALU slots free.
            h = pl.reciprocal(1.0 + jnp.exp(-y), approx=True)
        else:
            h = jax.nn.sigmoid(y)
    o_ref[...] = h.astype(o_ref.dtype)


def _round_up(n, m):
    return ((n + m - 1) // m) * m


def _estimate_vmem_bytes(tile_b, f0, f_out, layers, in_itemsize, out_itemsize):
    """Conservative VMEM estimate: double-buffered x/out tiles, resident
    weights/biases counted double-buffered, f32 intermediates per row."""
    fixed = 0
    for (w_t, b) in layers:
        fixed += 2 * (w_t.size * w_t.dtype.itemsize + b.size * b.dtype.itemsize)
    per_row = 2 * (f0 * in_itemsize + f_out * out_itemsize)
    per_row += 4 * sum(w_t.shape[1] for (w_t, _) in layers)  # f32 intermediates
    return fixed + tile_b * per_row


def autorec_forward(x, layers, *, compute_dtype=jnp.bfloat16, out_dtype=None,
                    tile_b=None, max_tile_b=512,
                    vmem_budget_bytes=40 * 1024 * 1024, precision=None):
    """Fused AutoRec forward.

    x:      (B, F0) — rows are items (item-based AutoRec) or users.
    layers: list of (w_t, b) with w_t (Fin, Fout) pre-transposed and b (1, Fout).
    compute_dtype: MXU operand dtype (bf16 default on every chip; f32 for a
                   tight numerical check — pass precision=lax.Precision.HIGHEST
                   if a 1e-5 match must hold on every TPU generation).
    tile_b: rows per grid step.  None -> whole (rounded) batch up to
            `max_tile_b` (grid == 1 on single-TC chips).  For v7x pass B // 2
            to give each TensorCore a tile.
    """
    B, F0 = x.shape
    n_layers = len(layers)
    assert layers[0][0].shape[0] == F0, "layer-0 input dim must match x features"
    acts = tuple("relu" if i < n_layers - 1 else "sigmoid"
                 for i in range(n_layers))

    compute_dtype = jnp.dtype(compute_dtype)
    out_dtype = jnp.dtype(x.dtype if out_dtype is None else out_dtype)
    f_out = layers[-1][0].shape[1]

    # Align operand dtypes: MXU operands in compute_dtype, biases in f32.
    aligned = []
    for (w_t, b) in layers:
        w_t = w_t if w_t.dtype == compute_dtype else w_t.astype(compute_dtype)
        b = b if b.dtype == jnp.float32 else b.astype(jnp.float32)
        aligned.append((w_t, b))
    layers = aligned

    # Feed the input tile in compute_dtype (halves the largest per-step DMA
    # on the bf16 path and removes a per-layer cast of the widest activation).
    x_in = x if x.dtype == compute_dtype else x.astype(compute_dtype)

    # ---- Row tiling: as few grid steps as possible, within the VMEM budget.
    in_itemsize = jnp.dtype(compute_dtype).itemsize
    out_itemsize = jnp.dtype(out_dtype).itemsize
    if tile_b is None:
        tile_b = min(_round_up(B, 8), max_tile_b)
    tile_b = max(8, _round_up(min(tile_b, _round_up(B, 8)), 8))
    while tile_b > 8 and _estimate_vmem_bytes(
            tile_b, F0, f_out, layers, in_itemsize, out_itemsize) > vmem_budget_bytes:
        tile_b = max(8, _round_up(tile_b // 2, 8))

    Bp = _round_up(B, tile_b)
    xp = x_in if Bp == B else jnp.pad(x_in, ((0, Bp - B), (0, 0)))

    # ---- BlockSpecs: x/out tiled over rows; weights/biases are full-array
    # blocks with constant index_maps -> resident in VMEM across grid steps.
    in_specs = [pl.BlockSpec((tile_b, F0), lambda i: (i, 0))]
    args = [xp]
    for (w_t, b) in layers:
        in_specs.append(pl.BlockSpec(w_t.shape, lambda i: (0, 0)))
        in_specs.append(pl.BlockSpec(b.shape, lambda i: (0, 0)))
        args.append(w_t)
        args.append(b)

    # ---- Explicit VMEM limit only when the estimate exceeds the scoped default.
    est = _estimate_vmem_bytes(tile_b, F0, f_out, layers, in_itemsize, out_itemsize)
    vmem_limit = int(est + 8 * 1024 * 1024) if est > 24 * 1024 * 1024 else None

    kernel = functools.partial(
        _fused_autorec_kernel, acts=acts, compute_dtype=compute_dtype,
        precision=precision,
        approx_sigmoid=(compute_dtype != jnp.dtype(jnp.float32)))

    out = pl.pallas_call(
        kernel,
        out_shape=jax.ShapeDtypeStruct((Bp, f_out), out_dtype),
        grid=(Bp // tile_b,),
        in_specs=in_specs,
        out_specs=pl.BlockSpec((tile_b, f_out), lambda i: (i, 0)),
        compiler_params=pltpu.CompilerParams(
            # Row tiles are independent -> shard across TensorCores (v7x).
            dimension_semantics=("parallel",),
            vmem_limit_bytes=vmem_limit,
        ),
    )(*args)
    # NOTE: padded rows pass sigmoid(bias) -> nonzero; slice them off here and
    # never alias the padded buffer to a consumer that reads all Bp rows.
    return out[:B] if Bp != B else out


# --------------------------- parameter construction ---------------------------
def xavier_uniform_t(key, in_features, out_features, dtype=jnp.float32):
    """Xavier-uniform weight stored directly in (in, out) layout (pre-transposed)."""
    bound = (6.0 / (in_features + out_features)) ** 0.5
    return jax.random.uniform(
        key, (in_features, out_features), dtype=dtype, minval=-bound, maxval=bound)


def init_autorec_params(key, num_users, num_items, hidden_dim, is_item=True):
    """Flat list of (w_t (Fin,Fout) f32, b (1,Fout) f32): encoder layers then
    decoder layers, same order as the forward pass."""
    dims = ([num_users] + hidden_dim) if is_item else ([num_items] + hidden_dim)
    layers = []
    for idx in range(len(dims) - 1):                       # encoder
        key, sub = jax.random.split(key)
        layers.append((xavier_uniform_t(sub, dims[idx], dims[idx + 1]),
                       jnp.zeros((1, dims[idx + 1]), jnp.float32)))
    for idx in range(len(dims) - 1, 0, -1):                # decoder
        key, sub = jax.random.split(key)
        layers.append((xavier_uniform_t(sub, dims[idx], dims[idx - 1]),
                       jnp.zeros((1, dims[idx - 1]), jnp.float32)))
    return layers


def cast_weights(layers, dtype):
    """Cast weights once at prep time (bf16 on every chip); biases stay f32."""
    return [(w_t.astype(dtype), b) for (w_t, b) in layers]


# ------------------------------- pure-JAX reference ---------------------------
def autorec_reference(x, layers):
    n = len(layers)
    for i, (w_t, b) in enumerate(layers):
        y = x @ w_t.astype(jnp.float32) + b
        x = jax.nn.sigmoid(y) if i == n - 1 else jax.nn.relu(y)
    return x


# ---------------------------------- main ---------------------------------------
if __name__ == "__main__":
    key = jax.random.PRNGKey(0)

    # Item-based AutoRec: input dim = num_users; rows = items.
    num_users = 256
    num_items = 384  # unused for layer sizing when is_item=True
    hidden_dim = [128, 64]
    batch = 256      # many items per forward -> real M dimension for the MXU

    key, pkey, xkey = jax.random.split(key, 3)
    layers = init_autorec_params(pkey, num_users, num_items, hidden_dim, is_item=True)
    x = jax.random.uniform(xkey, (batch, num_users), dtype=jnp.float32)

    ref = autorec_reference(x, layers)

    # f32 compute path (tight correctness check): auto tile_b -> one 256-row
    # tile, grid=1, no per-step overhead.
    out_f32 = jax.block_until_ready(
        autorec_forward(x, layers, compute_dtype=jnp.float32))
    assert out_f32.shape == (batch, num_users), out_f32.shape
    assert jnp.allclose(out_f32, ref, atol=1e-5, rtol=1e-5), "f32 mismatch vs reference"

    # Default fast path (every chip, incl. v5e): bf16 operands, f32 MXU
    # accumulate + f32 epilogue, bf16 input AND output tiles.
    layers_bf16 = cast_weights(layers, jnp.bfloat16)
    out_bf16 = jax.block_until_ready(
        autorec_forward(x, layers_bf16, compute_dtype=jnp.bfloat16,
                        out_dtype=jnp.bfloat16))
    assert out_bf16.shape == (batch, num_users), out_bf16.shape
    assert out_bf16.dtype == jnp.bfloat16
    assert jnp.allclose(out_bf16.astype(jnp.float32), ref, atol=3e-2, rtol=3e-2), \
        "bf16 mismatch vs reference"

    # v7x-style split: two row tiles (one per TensorCore), exercises grid > 1.
    out_2tc = jax.block_until_ready(
        autorec_forward(x, layers_bf16, compute_dtype=jnp.bfloat16,
                        out_dtype=jnp.bfloat16, tile_b=batch // 2))
    assert jnp.allclose(out_2tc.astype(jnp.float32), ref, atol=3e-2, rtol=3e-2), \
        "bf16 (2-tile) mismatch vs reference"

    print("KERNEL_OK")
</pallas_src>

<mosaic_0001>
module attributes {stable_mosaic.version = 11 : i64} {
  func.func @_fused_autorec_kernel(%arg0: i32, %arg1: memref<256x256xf32, #tpu.memory_space<vmem>>, %arg2: memref<256x128xf32, #tpu.memory_space<vmem>>, %arg3: memref<1x128xf32, #tpu.memory_space<vmem>>, %arg4: memref<128x64xf32, #tpu.memory_space<vmem>>, %arg5: memref<1x64xf32, #tpu.memory_space<vmem>>, %arg6: memref<64x128xf32, #tpu.memory_space<vmem>>, %arg7: memref<1x128xf32, #tpu.memory_space<vmem>>, %arg8: memref<128x256xf32, #tpu.memory_space<vmem>>, %arg9: memref<1x256xf32, #tpu.memory_space<vmem>>, %arg10: memref<256x256xf32, #tpu.memory_space<vmem>>) attributes {dimension_semantics = [#tpu.dimension_semantics<parallel>], iteration_bounds = array<i64: 1>, scalar_prefetch = 0 : i64, scratch_operands = 0 : i64, tpu.core_type = #tpu.core_type<tc>, window_params = [{transform_indices = @transform_0, window_bounds = array<i64: 256, 256>}, {pipeline_mode = #tpu.pipeline_mode<synchronous>, transform_indices = @transform_1, window_bounds = array<i64: 256, 128>}, {pipeline_mode = #tpu.pipeline_mode<synchronous>, transform_indices = @transform_2, window_bounds = array<i64: 1, 128>}, {pipeline_mode = #tpu.pipeline_mode<synchronous>, transform_indices = @transform_3, window_bounds = array<i64: 128, 64>}, {pipeline_mode = #tpu.pipeline_mode<synchronous>, transform_indices = @transform_4, window_bounds = array<i64: 1, 64>}, {pipeline_mode = #tpu.pipeline_mode<synchronous>, transform_indices = @transform_5, window_bounds = array<i64: 64, 128>}, {pipeline_mode = #tpu.pipeline_mode<synchronous>, transform_indices = @transform_6, window_bounds = array<i64: 1, 128>}, {pipeline_mode = #tpu.pipeline_mode<synchronous>, transform_indices = @transform_7, window_bounds = array<i64: 128, 256>}, {pipeline_mode = #tpu.pipeline_mode<synchronous>, transform_indices = @transform_8, window_bounds = array<i64: 1, 256>}, {transform_indices = @transform_9, window_bounds = array<i64: 256, 256>}]} {
    %c0 = arith.constant 0 : index
    %c0_0 = arith.constant 0 : index
    %0 = vector.load %arg1[%c0, %c0_0] : memref<256x256xf32, #tpu.memory_space<vmem>>, vector<256x256xf32>
    %c0_1 = arith.constant 0 : index
    %c0_2 = arith.constant 0 : index
    %1 = vector.load %arg2[%c0_1, %c0_2] : memref<256x128xf32, #tpu.memory_space<vmem>>, vector<256x128xf32>
    %cst = arith.constant dense<0.000000e+00> : vector<256x128xf32>
    %2 = tpu.matmul %0, %1, %cst {dimension_numbers = #tpu.dot_dimension_numbers<[1], [0], [0], [1], [0, 0, 1, 1], [], []>} : vector<256x256xf32>, vector<256x128xf32>, vector<256x128xf32> -> vector<256x128xf32>
    %c0_3 = arith.constant 0 : index
    %c0_4 = arith.constant 0 : index
    %3 = vector.load %arg3[%c0_3, %c0_4] : memref<1x128xf32, #tpu.memory_space<vmem>>, vector<1x128xf32>
    %4 = vector.broadcast %3 : vector<1x128xf32> to vector<256x128xf32>
    %5 = arith.addf %2, %4 : vector<256x128xf32>
    %cst_5 = arith.constant 0.000000e+00 : f32
    %6 = vector.broadcast %cst_5 : f32 to vector<256x128xf32>
    %7 = arith.maximumf %5, %6 : vector<256x128xf32>
    %c0_6 = arith.constant 0 : index
    %c0_7 = arith.constant 0 : index
    %8 = vector.load %arg4[%c0_6, %c0_7] : memref<128x64xf32, #tpu.memory_space<vmem>>, vector<128x64xf32>
    %cst_8 = arith.constant dense<0.000000e+00> : vector<256x64xf32>
    %9 = tpu.matmul %7, %8, %cst_8 {dimension_numbers = #tpu.dot_dimension_numbers<[1], [0], [0], [1], [0, 0, 1, 1], [], []>} : vector<256x128xf32>, vector<128x64xf32>, vector<256x64xf32> -> vector<256x64xf32>
    %c0_9 = arith.constant 0 : index
    %c0_10 = arith.constant 0 : index
    %10 = vector.load %arg5[%c0_9, %c0_10] : memref<1x64xf32, #tpu.memory_space<vmem>>, vector<1x64xf32>
    %11 = vector.broadcast %10 : vector<1x64xf32> to vector<256x64xf32>
    %12 = arith.addf %9, %11 : vector<256x64xf32>
    %cst_11 = arith.constant 0.000000e+00 : f32
    %13 = vector.broadcast %cst_11 : f32 to vector<256x64xf32>
    %14 = arith.maximumf %12, %13 : vector<256x64xf32>
    %c0_12 = arith.constant 0 : index
    %c0_13 = arith.constant 0 : index
    %15 = vector.load %arg6[%c0_12, %c0_13] : memref<64x128xf32, #tpu.memory_space<vmem>>, vector<64x128xf32>
    %cst_14 = arith.constant dense<0.000000e+00> : vector<256x128xf32>
    %16 = tpu.matmul %14, %15, %cst_14 {dimension_numbers = #tpu.dot_dimension_numbers<[1], [0], [0], [1], [0, 0, 1, 1], [], []>} : vector<256x64xf32>, vector<64x128xf32>, vector<256x128xf32> -> vector<256x128xf32>
    %c0_15 = arith.constant 0 : index
    %c0_16 = arith.constant 0 : index
    %17 = vector.load %arg7[%c0_15, %c0_16] : memref<1x128xf32, #tpu.memory_space<vmem>>, vector<1x128xf32>
    %18 = vector.broadcast %17 : vector<1x128xf32> to vector<256x128xf32>
    %19 = arith.addf %16, %18 : vector<256x128xf32>
    %cst_17 = arith.constant 0.000000e+00 : f32
    %20 = vector.broadcast %cst_17 : f32 to vector<256x128xf32>
    %21 = arith.maximumf %19, %20 : vector<256x128xf32>
    %c0_18 = arith.constant 0 : index
    %c0_19 = arith.constant 0 : index
    %22 = vector.load %arg8[%c0_18, %c0_19] : memref<128x256xf32, #tpu.memory_space<vmem>>, vector<128x256xf32>
    %cst_20 = arith.constant dense<0.000000e+00> : vector<256x256xf32>
    %23 = tpu.matmul %21, %22, %cst_20 {dimension_numbers = #tpu.dot_dimension_numbers<[1], [0], [0], [1], [0, 0, 1, 1], [], []>} : vector<256x128xf32>, vector<128x256xf32>, vector<256x256xf32> -> vector<256x256xf32>
    %c0_21 = arith.constant 0 : index
    %c0_22 = arith.constant 0 : index
    %24 = vector.load %arg9[%c0_21, %c0_22] : memref<1x256xf32, #tpu.memory_space<vmem>>, vector<1x256xf32>
    %25 = vector.broadcast %24 : vector<1x256xf32> to vector<256x256xf32>
    %26 = arith.addf %23, %25 : vector<256x256xf32>
    %27 = arith.negf %26 : vector<256x256xf32>
    %28 = math.exp %27 : vector<256x256xf32>
    %cst_23 = arith.constant 1.000000e+00 : f32
    %29 = vector.broadcast %cst_23 : f32 to vector<256x256xf32>
    %30 = arith.addf %29, %28 : vector<256x256xf32>
    %31 = arith.divf %29, %30 : vector<256x256xf32>
    %c0_24 = arith.constant 0 : index
    %c0_25 = arith.constant 0 : index
    %32 = vector.load %arg10[%c0_24, %c0_25] : memref<256x256xf32, #tpu.memory_space<vmem>>, vector<256x256xf32>
    tpu.vector_store %arg10[%c0_24, %c0_25], %31 {strides = array<i32>} : memref<256x256xf32, #tpu.memory_space<vmem>>, vector<256x256xf32>,
    return
  }
  func.func @transform_0(%arg0: i32) -> (i32, i32) {
    %c0_i32 = arith.constant 0 : i32
    %c0_i32_0 = arith.constant 0 : i32
    return %arg0, %c0_i32 : i32, i32
  }
  func.func @transform_1(%arg0: i32) -> (i32, i32) {
    %c0_i32 = arith.constant 0 : i32
    %c0_i32_0 = arith.constant 0 : i32
    %c0_i32_1 = arith.constant 0 : i32
    return %c0_i32, %c0_i32_0 : i32, i32
  }
  func.func @transform_2(%arg0: i32) -> (i32, i32) {
    %c0_i32 = arith.constant 0 : i32
    %c0_i32_0 = arith.constant 0 : i32
    %c0_i32_1 = arith.constant 0 : i32
    return %c0_i32, %c0_i32_0 : i32, i32
  }
  func.func @transform_3(%arg0: i32) -> (i32, i32) {
    %c0_i32 = arith.constant 0 : i32
    %c0_i32_0 = arith.constant 0 : i32
    %c0_i32_1 = arith.constant 0 : i32
    return %c0_i32, %c0_i32_0 : i32, i32
  }
  func.func @transform_4(%arg0: i32) -> (i32, i32) {
    %c0_i32 = arith.constant 0 : i32
    %c0_i32_0 = arith.constant 0 : i32
    %c0_i32_1 = arith.constant 0 : i32
    return %c0_i32, %c0_i32_0 : i32, i32
  }
  func.func @transform_5(%arg0: i32) -> (i32, i32) {
    %c0_i32 = arith.constant 0 : i32
    %c0_i32_0 = arith.constant 0 : i32
    %c0_i32_1 = arith.constant 0 : i32
    return %c0_i32, %c0_i32_0 : i32, i32
  }
  func.func @transform_6(%arg0: i32) -> (i32, i32) {
    %c0_i32 = arith.constant 0 : i32
    %c0_i32_0 = arith.constant 0 : i32
    %c0_i32_1 = arith.constant 0 : i32
    return %c0_i32, %c0_i32_0 : i32, i32
  }
  func.func @transform_7(%arg0: i32) -> (i32, i32) {
    %c0_i32 = arith.constant 0 : i32
    %c0_i32_0 = arith.constant 0 : i32
    %c0_i32_1 = arith.constant 0 : i32
    return %c0_i32, %c0_i32_0 : i32, i32
  }
  func.func @transform_8(%arg0: i32) -> (i32, i32) {
    %c0_i32 = arith.constant 0 : i32
    %c0_i32_0 = arith.constant 0 : i32
    %c0_i32_1 = arith.constant 0 : i32
    return %c0_i32, %c0_i32_0 : i32, i32
  }
  func.func @transform_9(%arg0: i32) -> (i32, i32) {
    %c0_i32 = arith.constant 0 : i32
    %c0_i32_0 = arith.constant 0 : i32
    return %arg0, %c0_i32 : i32, i32
  }
}

</mosaic_0001>

<llo_original>
// kernel: tpu_custom_call.1
$region0: #{tpu_custom_call.1}
  #allocation0 [shape = 'u32[]', space=smem, size = 0x4, offset = 0x4, fixed_abs, tag = 'smem constant byte address 0x4 - core index']
  #allocation1 [shape = 'u32[144,128]{1,0:T(1,128)}', space=vmem, size = 0x12000, scoped, tag = 'internal scratch']
  %s0 = inlined_call_operand.hbm [shape: f32[256,256], index: 0, kind: input, shape index: {}]
  %s1 = inlined_call_operand.hbm [shape: f32[256,128], index: 1, kind: input, shape index: {}]
  %s2 = inlined_call_operand.vmem [shape: f32[1,128], index: 2, kind: input, shape index: {}]
  %s3 = inlined_call_operand.vmem [shape: f32[128,64], index: 3, kind: input, shape index: {}]
  %s4 = inlined_call_operand.vmem [shape: f32[1,64], index: 4, kind: input, shape index: {}]
  %s5 = inlined_call_operand.vmem [shape: f32[64,128], index: 5, kind: input, shape index: {}]
  %s6 = inlined_call_operand.vmem [shape: f32[1,128], index: 6, kind: input, shape index: {}]
  %s7 = inlined_call_operand.hbm [shape: f32[128,256], index: 7, kind: input, shape index: {}]
  %s8 = inlined_call_operand.vmem [shape: f32[1,256], index: 8, kind: input, shape index: {}]
  %s9 = inlined_call_operand.hbm [shape: f32[256,256], index: 9, kind: output, shape index: {}]
  %s10 = sld [smem:[#allocation0]]
  $region58: #{tpu_custom_call.1} parent=0
    _
  %s12 = ssub.s32 1, %s10
  %s13 = scalar_select 0, %s12, %s10
  $region1: #{tpu_custom_call.1} parent=0
    #allocation2 [shape = 'u8[262144]{0}', space=vmem, size = 0x40000, scoped, tag = 'input window, operand 0, single buffered']
    #allocation3 [shape = 's32[1]{0}', space=sflag, size = 0x4, scoped, tag = 'scoped memory for tpu_custom_call.1']
    #allocation4 [shape = 's32[1]{0}', space=sflag, size = 0x4, scoped, tag = 'scoped memory for tpu_custom_call.1']
    #allocation5 [shape = 'u8[131072]{0}', space=vmem, size = 0x20000, scoped, tag = 'input window, operand 1, single buffered']
    #allocation6 [shape = 's32[1]{0}', space=sflag, size = 0x4, scoped, tag = 'scoped memory for tpu_custom_call.1']
    #allocation7 [shape = 'u8[131072]{0}', space=vmem, size = 0x20000, scoped, tag = 'input window, operand 7, single buffered']
    #allocation8 [shape = 'u8[262144]{0}', space=vmem, size = 0x40000, scoped, tag = 'output window, operand 0, single buffered']
    %14 = vsyncpa [#allocation3], 0
    %15 = vsyncpa [#allocation6], 0
    %16 = vsyncpa [#allocation4], 0
    // Predicated region
    $region2: #{tpu_custom_call.1} parent=1 // pred_check
      _
    $region3: #{tpu_custom_call.1} parent=1 // pred_check_branch
      %18 = sbr.rel (0) target = $region5
    $region4: #{tpu_custom_call.1} parent=1 // pred_region
      %s20 = ssub.s32 8192, 8192
      %21 = vsyncadd [#allocation3], %s20
      %s22 = sshll.u32 [#allocation2], 4
      %s23 = int_to_ptr.vmem [resolvable:$true] %s22
      %28 = dma.hbm_to_vmem [thread:$0]  %s0, 8192, %s23, [#allocation3], 256, 256, 16
    $region5: #{tpu_custom_call.1} parent=1 // pred_fallthru
      _
    // Predicated region
    $region6: #{tpu_custom_call.1} parent=1 // pred_check
      _
    $region7: #{tpu_custom_call.1} parent=1 // pred_check_branch
      %30 = sbr.rel (0) target = $region9
    $region8: #{tpu_custom_call.1} parent=1 // pred_region
      %s32 = ssub.s32 4096, 4096
      %33 = vsyncadd [#allocation6], %s32
      %s34 = sshll.u32 [#allocation5], 4
      %s35 = int_to_ptr.vmem [resolvable:$true] %s34
      %40 = dma.hbm_to_vmem [thread:$0]  %s1, 4096, %s35, [#allocation6], 128, 128, 8
    $region9: #{tpu_custom_call.1} parent=1 // pred_fallthru
      _
    // Predicated region
    $region10: #{tpu_custom_call.1} parent=1 // pred_check
      _
    $region11: #{tpu_custom_call.1} parent=1 // pred_check_branch
      %42 = sbr.rel (0) target = $region13
    $region12: #{tpu_custom_call.1} parent=1 // pred_region
      _
    $region13: #{tpu_custom_call.1} parent=1 // pred_fallthru
      _
    // Predicated region
    $region14: #{tpu_custom_call.1} parent=1 // pred_check
      _
    $region15: #{tpu_custom_call.1} parent=1 // pred_check_branch
      %44 = sbr.rel (0) target = $region17
    $region16: #{tpu_custom_call.1} parent=1 // pred_region
      _
    $region17: #{tpu_custom_call.1} parent=1 // pred_fallthru
      _
    // Predicated region
    $region18: #{tpu_custom_call.1} parent=1 // pred_check
      _
    $region19: #{tpu_custom_call.1} parent=1 // pred_check_branch
      %46 = sbr.rel (0) target = $region21
    $region20: #{tpu_custom_call.1} parent=1 // pred_region
      _
    $region21: #{tpu_custom_call.1} parent=1 // pred_fallthru
      _
    // Predicated region
    $region22: #{tpu_custom_call.1} parent=1 // pred_check
      _
    $region23: #{tpu_custom_call.1} parent=1 // pred_check_branch
      %48 = sbr.rel (0) target = $region25
    $region24: #{tpu_custom_call.1} parent=1 // pred_region
      _
    $region25: #{tpu_custom_call.1} parent=1 // pred_fallthru
      _
    // Predicated region
    $region26: #{tpu_custom_call.1} parent=1 // pred_check
      _
    $region27: #{tpu_custom_call.1} parent=1 // pred_check_branch
      %50 = sbr.rel (0) target = $region29
    $region28: #{tpu_custom_call.1} parent=1 // pred_region
      _
    $region29: #{tpu_custom_call.1} parent=1 // pred_fallthru
      _
    // Predicated region
    $region30: #{tpu_custom_call.1} parent=1 // pred_check
      _
    $region31: #{tpu_custom_call.1} parent=1 // pred_check_branch
      %52 = sbr.rel (0) target = $region33
    $region32: #{tpu_custom_call.1} parent=1 // pred_region
      %s54 = ssub.s32 4096, 4096
      %55 = vsyncadd [#allocation6], %s54
      %s56 = sshll.u32 [#allocation7], 4
      %s57 = int_to_ptr.vmem [resolvable:$true] %s56
      %62 = dma.hbm_to_vmem [thread:$0]  %s7, 4096, %s57, [#allocation6], 256, 256, 16
    $region33: #{tpu_custom_call.1} parent=1 // pred_fallthru
      _
    // Predicated region
    $region34: #{tpu_custom_call.1} parent=1 // pred_check
      _
    $region35: #{tpu_custom_call.1} parent=1 // pred_check_branch
      %64 = sbr.rel (0) target = $region37
    $region36: #{tpu_custom_call.1} parent=1 // pred_region
      _
    $region37: #{tpu_custom_call.1} parent=1 // pred_fallthru
      _
    // Predicated region
    $region38: #{tpu_custom_call.1} parent=1 // pred_check
      _
    $region39: #{tpu_custom_call.1} parent=1 // pred_check_branch
      %66 = sbr.rel (0) target = $region41
    $region40: #{tpu_custom_call.1} parent=1 // pred_region
      %67 = dma.done [#allocation3], 8192
    $region41: #{tpu_custom_call.1} parent=1 // pred_fallthru
      _
    // Predicated region
    $region42: #{tpu_custom_call.1} parent=1 // pred_check
      _
    $region43: #{tpu_custom_call.1} parent=1 // pred_check_branch
      %69 = sbr.rel (0) target = $region45
    $region44: #{tpu_custom_call.1} parent=1 // pred_region
      %70 = dma.done [#allocation6], 4096
    $region45: #{tpu_custom_call.1} parent=1 // pred_fallthru
      _
    // Predicated region
    $region46: #{tpu_custom_call.1} parent=1 // pred_check
      _
    $region47: #{tpu_custom_call.1} parent=1 // pred_check_branch
      %72 = sbr.rel (0) target = $region49
    $region48: #{tpu_custom_call.1} parent=1 // pred_region
      %73 = dma.done [#allocation6], 4096
    $region49: #{tpu_custom_call.1} parent=1 // pred_fallthru
      _
    %v74 = vld [vmem:[#allocation2] sm:$0xff]
    %v75 = vld [vmem:[#allocation2 + $0x8] sm:$0xff]
    %v76 = vld [vmem:[#allocation2 + $0x10] sm:$0xff]
    %v77 = vld [vmem:[#allocation2 + $0x18] sm:$0xff]
    %v78 = vld [vmem:[#allocation2 + $0x20] sm:$0xff]
    %v79 = vld [vmem:[#allocation2 + $0x28] sm:$0xff]
    %v80 = vld [vmem:[#allocation2 + $0x30] sm:$0xff]
    %v81 = vld [vmem:[#allocation2 + $0x38] sm:$0xff]
    %v82 = vld [vmem:[#allocation2 + $0x40] sm:$0xff]
    %v83 = vld [vmem:[#allocation2 + $0x48] sm:$0xff]
    %v84 = vld [vmem:[#allocation2 + $0x50] sm:$0xff]
    %v85 = vld [vmem:[#allocation2 + $0x58] sm:$0xff]
    %v86 = vld [vmem:[#allocation2 + $0x60] sm:$0xff]
    %v87 = vld [vmem:[#allocation2 + $0x68] sm:$0xff]
    %v88 = vld [vmem:[#allocation2 + $0x70] sm:$0xff]
    %v89 = vld [vmem:[#allocation2 + $0x78] sm:$0xff]
    %v90 = vld [vmem:[#allocation2 + $0x80] sm:$0xff]
    %v91 = vld [vmem:[#allocation2 + $0x88] sm:$0xff]
    %v92 = vld [vmem:[#allocation2 + $0x90] sm:$0xff]
    %v93 = vld [vmem:[#allocation2 + $0x98] sm:$0xff]
    %v94 = vld [vmem:[#allocation2 + $0xa0] sm:$0xff]
    %v95 = vld [vmem:[#allocation2 + $0xa8] sm:$0xff]
    %v96 = vld [vmem:[#allocation2 + $0xb0] sm:$0xff]
    %v97 = vld [vmem:[#allocation2 + $0xb8] sm:$0xff]
    %v98 = vld [vmem:[#allocation2 + $0xc0] sm:$0xff]
    %v99 = vld [vmem:[#allocation2 + $0xc8] sm:$0xff]
    %v100 = vld [vmem:[#allocation2 + $0xd0] sm:$0xff]
    %v101 = vld [vmem:[#allocation2 + $0xd8] sm:$0xff]
    %v102 = vld [vmem:[#allocation2 + $0xe0] sm:$0xff]
    %v103 = vld [vmem:[#allocation2 + $0xe8] sm:$0xff]
    %v104 = vld [vmem:[#allocation2 + $0xf0] sm:$0xff]
    %v105 = vld [vmem:[#allocation2 + $0xf8] sm:$0xff]
    %v106 = vld [vmem:[#allocation2 + $0x100] sm:$0xff]
    %v107 = vld [vmem:[#allocation2 + $0x108] sm:$0xff]
    %v108 = vld [vmem:[#allocation2 + $0x110] sm:$0xff]
    %v109 = vld [vmem:[#allocation2 + $0x118] sm:$0xff]
    %v110 = vld [vmem:[#allocation2 + $0x120] sm:$0xff]
    %v111 = vld [vmem:[#allocation2 + $0x128] sm:$0xff]
    %v112 = vld [vmem:[#allocation2 + $0x130] sm:$0xff]
    %v113 = vld [vmem:[#allocation2 + $0x138] sm:$0xff]
    %v114 = vld [vmem:[#allocation2 + $0x140] sm:$0xff]
    %v115 = vld [vmem:[#allocation2 + $0x148] sm:$0xff]
    %v116 = vld [vmem:[#allocation2 + $0x150] sm:$0xff]
    %v117 = vld [vmem:[#allocation2 + $0x158] sm:$0xff]
    %v118 = vld [vmem:[#allocation2 + $0x160] sm:$0xff]
    %v119 = vld [vmem:[#allocation2 + $0x168] sm:$0xff]
    %v120 = vld [vmem:[#allocation2 + $0x170] sm:$0xff]
    %v121 = vld [vmem:[#allocation2 + $0x178] sm:$0xff]
    %v122 = vld [vmem:[#allocation2 + $0x180] sm:$0xff]
    %v123 = vld [vmem:[#allocation2 + $0x188] sm:$0xff]
    %v124 = vld [vmem:[#allocation2 + $0x190] sm:$0xff]
    %v125 = vld [vmem:[#allocation2 + $0x198] sm:$0xff]
    %v126 = vld [vmem:[#allocation2 + $0x1a0] sm:$0xff]
    %v127 = vld [vmem:[#allocation2 + $0x1a8] sm:$0xff]
    %v128 = vld [vmem:[#allocation2 + $0x1b0] sm:$0xff]
    %v129 = vld [vmem:[#allocation2 + $0x1b8] sm:$0xff]
    %v130 = vld [vmem:[#allocation2 + $0x1c0] sm:$0xff]
    %v131 = vld [vmem:[#allocation2 + $0x1c8] sm:$0xff]
    %v132 = vld [vmem:[#allocation2 + $0x1d0] sm:$0xff]
    %v133 = vld [vmem:[#allocation2 + $0x1d8] sm:$0xff]
    %v134 = vld [vmem:[#allocation2 + $0x1e0] sm:$0xff]
    %v135 = vld [vmem:[#allocation2 + $0x1e8] sm:$0xff]
    %v136 = vld [vmem:[#allocation2 + $0x1f0] sm:$0xff]
    %v137 = vld [vmem:[#allocation2 + $0x1f8] sm:$0xff]
    %v138 = vld [vmem:[#allocation5] sm:$0xff]
    %v139 = vld [vmem:[#allocation5 + $0x8] sm:$0xff]
    %v140 = vld [vmem:[#allocation5 + $0x10] sm:$0xff]
    %v141 = vld [vmem:[#allocation5 + $0x18] sm:$0xff]
    %v142 = vld [vmem:[#allocation5 + $0x20] sm:$0xff]
    %v143 = vld [vmem:[#allocation5 + $0x28] sm:$0xff]
    %v144 = vld [vmem:[#allocation5 + $0x30] sm:$0xff]
    %v145 = vld [vmem:[#allocation5 + $0x38] sm:$0xff]
    %v146 = vld [vmem:[#allocation5 + $0x40] sm:$0xff]
    %v147 = vld [vmem:[#allocation5 + $0x48] sm:$0xff]
    %v148 = vld [vmem:[#allocation5 + $0x50] sm:$0xff]
    %v149 = vld [vmem:[#allocation5 + $0x58] sm:$0xff]
    %v150 = vld [vmem:[#allocation5 + $0x60] sm:$0xff]
    %v151 = vld [vmem:[#allocation5 + $0x68] sm:$0xff]
    %v152 = vld [vmem:[#allocation5 + $0x70] sm:$0xff]
    %v153 = vld [vmem:[#allocation5 + $0x78] sm:$0xff]
    %v154 = vld [vmem:[#allocation5 + $0x80] sm:$0xff]
    %v155 = vld [vmem:[#allocation5 + $0x88] sm:$0xff]
    %v156 = vld [vmem:[#allocation5 + $0x90] sm:$0xff]
    %v157 = vld [vmem:[#allocation5 + $0x98] sm:$0xff]
    %v158 = vld [vmem:[#allocation5 + $0xa0] sm:$0xff]
    %v159 = vld [vmem:[#allocation5 + $0xa8] sm:$0xff]
    %v160 = vld [vmem:[#allocation5 + $0xb0] sm:$0xff]
    %v161 = vld [vmem:[#allocation5 + $0xb8] sm:$0xff]
    %v162 = vld [vmem:[#allocation5 + $0xc0] sm:$0xff]
    %v163 = vld [vmem:[#allocation5 + $0xc8] sm:$0xff]
    %v164 = vld [vmem:[#allocation5 + $0xd0] sm:$0xff]
    %v165 = vld [vmem:[#allocation5 + $0xd8] sm:$0xff]
    %v166 = vld [vmem:[#allocation5 + $0xe0] sm:$0xff]
    %v167 = vld [vmem:[#allocation5 + $0xe8] sm:$0xff]
    %v168 = vld [vmem:[#allocation5 + $0xf0] sm:$0xff]
    %v169 = vld [vmem:[#allocation5 + $0xf8] sm:$0xff]
    %v170 = vld [vmem:[%s2] sm:$0x1]
    %v172 = vlaneseq
    %v173 = vshrl.u32 %v172, 7
    %v174 = vsub.s32 0, %v173
    %v175 = vrot.slane %v170, %v174
    %177 = vmatprep.subr.mxu0 0.0
    %178 = vmatpush1.msra.mxu0 %v153
    %179 = vmatprep.subr.mxu0 0.0
    %180 = vmatpush1.msra.mxu0 %v152
    %181 = vmatprep.subr.mxu0 0.0
    %182 = vmatpush1.msra.mxu0 %v151
    %183 = vmatprep.subr.mxu0 0.0
    %184 = vmatpush1.msra.mxu0 %v150
    %185 = vmatprep.subr.mxu0 0.0
    %186 = vmatpush1.msra.mxu0 %v149
    %187 = vmatprep.subr.mxu0 0.0
    %188 = vmatpush1.msra.mxu0 %v148
    %189 = vmatprep.subr.mxu0 0.0
    %190 = vmatpush1.msra.mxu0 %v147
    %191 = vmatprep.subr.mxu0 0.0
    %192 = vmatpush1.msra.mxu0 %v146
    %193 = vmatprep.subr.mxu0 0.0
    %194 = vmatpush1.msra.mxu0 %v145
    %195 = vmatprep.subr.mxu0 0.0
    %196 = vmatpush1.msra.mxu0 %v144
    %197 = vmatprep.subr.mxu0 0.0
    %198 = vmatpush1.msra.mxu0 %v143
    %199 = vmatprep.subr.mxu0 0.0
    %200 = vmatpush1.msra.mxu0 %v142
    %201 = vmatprep.subr.mxu0 0.0
    %202 = vmatpush1.msra.mxu0 %v141
    %203 = vmatprep.subr.mxu0 0.0
    %204 = vmatpush1.msra.mxu0 %v140
    %205 = vmatprep.subr.mxu0 0.0
    %206 = vmatpush1.msra.mxu0 %v139
    %207 = vmatprep.subr.mxu0 0.0
    %208 = vmatpush1.msra.mxu0 %v138
    %209 = vmatprep.subr.mxu0 0.0
    %210 = vmatpush2.msra.mxu0 %v169
    %211 = vmatprep.subr.mxu0 0.0
    %212 = vmatpush2.msra.mxu0 %v168
    %213 = vmatprep.subr.mxu0 0.0
    %214 = vmatpush2.msra.mxu0 %v167
    %215 = vmatprep.subr.mxu0 0.0
    %216 = vmatpush2.msra.mxu0 %v166
    %217 = vmatprep.subr.mxu0 0.0
    %218 = vmatpush2.msra.mxu0 %v165
    %219 = vmatprep.subr.mxu0 0.0
    %220 = vmatpush2.msra.mxu0 %v164
    %221 = vmatprep.subr.mxu0 0.0
    %222 = vmatpush2.msra.mxu0 %v163
    %223 = vmatprep.subr.mxu0 0.0
    %224 = vmatpush2.msra.mxu0 %v162
    %225 = vmatprep.subr.mxu0 0.0
    %226 = vmatpush2.msra.mxu0 %v161
    %227 = vmatprep.subr.mxu0 0.0
    %228 = vmatpush2.msra.mxu0 %v160
    %229 = vmatprep.subr.mxu0 0.0
    %230 = vmatpush2.msra.mxu0 %v159
    %231 = vmatprep.subr.mxu0 0.0
    %232 = vmatpush2.msra.mxu0 %v158
    %233 = vmatprep.subr.mxu0 0.0
    %234 = vmatpush2.msra.mxu0 %v157
    %235 = vmatprep.subr.mxu0 0.0
    %236 = vmatpush2.msra.mxu0 %v156
    %237 = vmatprep.subr.mxu0 0.0
    %238 = vmatpush2.msra.mxu0 %v155
    %239 = vmatprep.subr.mxu0 0.0
    %240 = vmatpush2.msra.mxu0 %v154
    %241 = vmatprep.mubr.f32.mxu0 %v75
    %242 = vmatmul.mubr.f32.gmra.mxu0 %v74
    %v243 = vpop.f32.mrf.mxu0
    %v244 = vadd.f32 %v175, %v243
    %v245 = vpop.f32.mrf.mxu0
    %246 = vmatprep.mubr.f32.mxu0 %v77
    %247 = vmatmul.mubr.f32.gmra.mxu0 %v76
    %v248 = vpop.f32.mrf.mxu0
    %v249 = vadd.f32 %v175, %v248
    %v250 = vpop.f32.mrf.mxu0
    %251 = vmatprep.mubr.f32.mxu0 %v79
    %252 = vmatmul.mubr.f32.gmra.mxu0 %v78
    %v253 = vpop.f32.mrf.mxu0
    %v254 = vadd.f32 %v175, %v253
    %v255 = vpop.f32.mrf.mxu0
    %256 = vmatprep.mubr.f32.mxu0 %v81
    %257 = vmatmul.mubr.f32.gmra.mxu0 %v80
    %v258 = vpop.f32.mrf.mxu0
    %v259 = vadd.f32 %v175, %v258
    %v260 = vpop.f32.mrf.mxu0
    %261 = vmatprep.mubr.f32.mxu0 %v83
    %262 = vmatmul.mubr.f32.gmra.mxu0 %v82
    %v263 = vpop.f32.mrf.mxu0
    %v264 = vadd.f32 %v175, %v263
    %v265 = vpop.f32.mrf.mxu0
    %266 = vmatprep.mubr.f32.mxu0 %v85
    %267 = vmatmul.mubr.f32.gmra.mxu0 %v84
    %v268 = vpop.f32.mrf.mxu0
    %v269 = vadd.f32 %v175, %v268
    %v270 = vpop.f32.mrf.mxu0
    %271 = vmatprep.mubr.f32.mxu0 %v87
    %272 = vmatmul.mubr.f32.gmra.mxu0 %v86
    %v273 = vpop.f32.mrf.mxu0
    %v274 = vadd.f32 %v175, %v273
    %v275 = vpop.f32.mrf.mxu0
    %276 = vmatprep.mubr.f32.mxu0 %v89
    %277 = vmatmul.mubr.f32.gmra.mxu0 %v88
    %v278 = vpop.f32.mrf.mxu0
    %v279 = vadd.f32 %v175, %v278
    %v280 = vpop.f32.mrf.mxu0
    %281 = vmatprep.mubr.f32.mxu0 %v91
    %282 = vmatmul.mubr.f32.gmra.mxu0 %v90
    %v283 = vpop.f32.mrf.mxu0
    %v284 = vadd.f32 %v175, %v283
    %v285 = vpop.f32.mrf.mxu0
    %286 = vmatprep.mubr.f32.mxu0 %v93
    %287 = vmatmul.mubr.f32.gmra.mxu0 %v92
    %v288 = vpop.f32.mrf.mxu0
    %v289 = vadd.f32 %v175, %v288
    %v290 = vpop.f32.mrf.mxu0
    %291 = vmatprep.mubr.f32.mxu0 %v95
    %292 = vmatmul.mubr.f32.gmra.mxu0 %v94
    %v293 = vpop.f32.mrf.mxu0
    %v294 = vadd.f32 %v175, %v293
    %v295 = vpop.f32.mrf.mxu0
    %296 = vmatprep.mubr.f32.mxu0 %v97
    %297 = vmatmul.mubr.f32.gmra.mxu0 %v96
    %v298 = vpop.f32.mrf.mxu0
    %v299 = vadd.f32 %v175, %v298
    %v300 = vpop.f32.mrf.mxu0
    %301 = vmatprep.mubr.f32.mxu0 %v99
    %302 = vmatmul.mubr.f32.gmra.mxu0 %v98
    %v303 = vpop.f32.mrf.mxu0
    %v304 = vadd.f32 %v175, %v303
    %v305 = vpop.f32.mrf.mxu0
    %306 = vmatprep.mubr.f32.mxu0 %v101
    %307 = vmatmul.mubr.f32.gmra.mxu0 %v100
    %v308 = vpop.f32.mrf.mxu0
    %v309 = vadd.f32 %v175, %v308
    %v310 = vpop.f32.mrf.mxu0
    %311 = vmatprep.mubr.f32.mxu0 %v103
    %312 = vmatmul.mubr.f32.gmra.mxu0 %v102
    %v313 = vpop.f32.mrf.mxu0
    %v314 = vadd.f32 %v175, %v313
    %v315 = vpop.f32.mrf.mxu0
    %316 = vmatprep.mubr.f32.mxu0 %v105
    %317 = vmatmul.mubr.f32.gmra.mxu0 %v104
    %v318 = vpop.f32.mrf.mxu0
    %v319 = vadd.f32 %v175, %v318
    %v320 = vpop.f32.mrf.mxu0
    %321 = vmatprep.mubr.f32.mxu0 %v107
    %322 = vmatmul.mubr.f32.gmra.mxu0 %v106
    %v323 = vpop.f32.mrf.mxu0
    %v324 = vadd.f32 %v175, %v323
    %v325 = vpop.f32.mrf.mxu0
    %326 = vmatprep.mubr.f32.mxu0 %v109
    %327 = vmatmul.mubr.f32.gmra.mxu0 %v108
    %v328 = vpop.f32.mrf.mxu0
    %v329 = vadd.f32 %v175, %v328
    %v330 = vpop.f32.mrf.mxu0
    %331 = vmatprep.mubr.f32.mxu0 %v111
    %332 = vmatmul.mubr.f32.gmra.mxu0 %v110
    %v333 = vpop.f32.mrf.mxu0
    %v334 = vadd.f32 %v175, %v333
    %v335 = vpop.f32.mrf.mxu0
    %336 = vmatprep.mubr.f32.mxu0 %v113
    %337 = vmatmul.mubr.f32.gmra.mxu0 %v112
    %v338 = vpop.f32.mrf.mxu0
    %v339 = vadd.f32 %v175, %v338
    %v340 = vpop.f32.mrf.mxu0
    %341 = vmatprep.mubr.f32.mxu0 %v115
    %342 = vmatmul.mubr.f32.gmra.mxu0 %v114
    %v343 = vpop.f32.mrf.mxu0
    %v344 = vadd.f32 %v175, %v343
    %v345 = vpop.f32.mrf.mxu0
    %346 = vmatprep.mubr.f32.mxu0 %v117
    %347 = vmatmul.mubr.f32.gmra.mxu0 %v116
    %v348 = vpop.f32.mrf.mxu0
    %v349 = vadd.f32 %v175, %v348
    %v350 = vpop.f32.mrf.mxu0
    %351 = vmatprep.mubr.f32.mxu0 %v119
    %352 = vmatmul.mubr.f32.gmra.mxu0 %v118
    %v353 = vpop.f32.mrf.mxu0
    %v354 = vadd.f32 %v175, %v353
    %v355 = vpop.f32.mrf.mxu0
    %356 = vmatprep.mubr.f32.mxu0 %v121
    %357 = vmatmul.mubr.f32.gmra.mxu0 %v120
    %v358 = vpop.f32.mrf.mxu0
    %v359 = vadd.f32 %v175, %v358
    %v360 = vpop.f32.mrf.mxu0
    %361 = vmatprep.mubr.f32.mxu0 %v123
    %362 = vmatmul.mubr.f32.gmra.mxu0 %v122
    %v363 = vpop.f32.mrf.mxu0
    %v364 = vadd.f32 %v175, %v363
    %v365 = vpop.f32.mrf.mxu0
    %366 = vmatprep.mubr.f32.mxu0 %v125
    %367 = vmatmul.mubr.f32.gmra.mxu0 %v124
    %v368 = vpop.f32.mrf.mxu0
    %v369 = vadd.f32 %v175, %v368
    %v370 = vpop.f32.mrf.mxu0
    %371 = vmatprep.mubr.f32.mxu0 %v127
    %372 = vmatmul.mubr.f32.gmra.mxu0 %v126
    %v373 = vpop.f32.mrf.mxu0
    %v374 = vadd.f32 %v175, %v373
    %v375 = vpop.f32.mrf.mxu0
    %376 = vmatprep.mubr.f32.mxu0 %v129
    %377 = vmatmul.mubr.f32.gmra.mxu0 %v128
    %v378 = vpop.f32.mrf.mxu0
    %v379 = vadd.f32 %v175, %v378
    %v380 = vpop.f32.mrf.mxu0
    %381 = vmatprep.mubr.f32.mxu0 %v131
    %382 = vmatmul.mubr.f32.gmra.mxu0 %v130
    %v383 = vpop.f32.mrf.mxu0
    %v384 = vadd.f32 %v175, %v383
    %v385 = vpop.f32.mrf.mxu0
    %386 = vmatprep.mubr.f32.mxu0 %v133
    %387 = vmatmul.mubr.f32.gmra.mxu0 %v132
    %v388 = vpop.f32.mrf.mxu0
    %v389 = vadd.f32 %v175, %v388
    %v390 = vpop.f32.mrf.mxu0
    %391 = vmatprep.mubr.f32.mxu0 %v135
    %392 = vmatmul.mubr.f32.gmra.mxu0 %v134
    %v393 = vpop.f32.mrf.mxu0
    %v394 = vadd.f32 %v175, %v393
    %v395 = vpop.f32.mrf.mxu0
    %396 = vmatprep.mubr.f32.mxu0 %v137
    %397 = vmatmul.mubr.f32.gmra.mxu0 %v136
    %v398 = vpop.f32.mrf.mxu0
    %v399 = vadd.f32 %v175, %v398
    %v400 = vpop.f32.mrf.mxu0
    %401 = vdwg.mxu0
    %v402 = vmax.f32 %v244, 0.0
    %v403 = vmax.f32 %v249, 0.0
    %v404 = vmax.f32 %v254, 0.0
    %v405 = vmax.f32 %v259, 0.0
    %v406 = vmax.f32 %v264, 0.0
    %v407 = vmax.f32 %v269, 0.0
    %v408 = vmax.f32 %v274, 0.0
    %v409 = vmax.f32 %v279, 0.0
    %v410 = vmax.f32 %v284, 0.0
    %v411 = vmax.f32 %v289, 0.0
    %v412 = vmax.f32 %v294, 0.0
    %v413 = vmax.f32 %v299, 0.0
    %v414 = vmax.f32 %v304, 0.0
    %v415 = vmax.f32 %v309, 0.0
    %v416 = vmax.f32 %v314, 0.0
    %v417 = vmax.f32 %v319, 0.0
    %v418 = vmax.f32 %v324, 0.0
    %v419 = vmax.f32 %v329, 0.0
    %v420 = vmax.f32 %v334, 0.0
    %v421 = vmax.f32 %v339, 0.0
    %v422 = vmax.f32 %v344, 0.0
    %v423 = vmax.f32 %v349, 0.0
    %v424 = vmax.f32 %v354, 0.0
    %v425 = vmax.f32 %v359, 0.0
    %v426 = vmax.f32 %v364, 0.0
    %v427 = vmax.f32 %v369, 0.0
    %v428 = vmax.f32 %v374, 0.0
    %v429 = vmax.f32 %v379, 0.0
    %v430 = vmax.f32 %v384, 0.0
    %v431 = vmax.f32 %v389, 0.0
    %v432 = vmax.f32 %v394, 0.0
    %v433 = vmax.f32 %v399, 0.0
    %v434 = vld [vmem:[%s3] sm:$0xff]
    %v435 = vld [vmem:[%s3 + $0x8] sm:$0xff]
    %v436 = vld [vmem:[%s3 + $0x10] sm:$0xff]
    %v437 = vld [vmem:[%s3 + $0x18] sm:$0xff]
    %v438 = vld [vmem:[%s3 + $0x20] sm:$0xff]
    %v439 = vld [vmem:[%s3 + $0x28] sm:$0xff]
    %v440 = vld [vmem:[%s3 + $0x30] sm:$0xff]
    %v441 = vld [vmem:[%s3 + $0x38] sm:$0xff]
    %v442 = vld [vmem:[%s3 + $0x40] sm:$0xff]
    %v443 = vld [vmem:[%s3 + $0x48] sm:$0xff]
    %v444 = vld [vmem:[%s3 + $0x50] sm:$0xff]
    %v445 = vld [vmem:[%s3 + $0x58] sm:$0xff]
    %v446 = vld [vmem:[%s3 + $0x60] sm:$0xff]
    %v447 = vld [vmem:[%s3 + $0x68] sm:$0xff]
    %v448 = vld [vmem:[%s3 + $0x70] sm:$0xff]
    %v449 = vld [vmem:[%s3 + $0x78] sm:$0xff]
    %v450 = vld [vmem:[%s4] sm:$0x1]
    %v452 = vlaneseq
    %v453 = vshrl.u32 %v452, 7
    %v454 = vsub.s32 0, %v453
    %v455 = vrot.slane %v450, %v454
    %457 = vmatprep.subr.mxu0 0.0
    %458 = vmatpush1.msra.mxu0 %v449
    %459 = vmatprep.subr.mxu0 0.0
    %460 = vmatpush1.msra.mxu0 %v448
    %461 = vmatprep.subr.mxu0 0.0
    %462 = vmatpush1.msra.mxu0 %v447
    %463 = vmatprep.subr.mxu0 0.0
    %464 = vmatpush1.msra.mxu0 %v446
    %465 = vmatprep.subr.mxu0 0.0
    %466 = vmatpush1.msra.mxu0 %v445
    %467 = vmatprep.subr.mxu0 0.0
    %468 = vmatpush1.msra.mxu0 %v444
    %469 = vmatprep.subr.mxu0 0.0
    %470 = vmatpush1.msra.mxu0 %v443
    %471 = vmatprep.subr.mxu0 0.0
    %472 = vmatpush1.msra.mxu0 %v442
    %473 = vmatprep.subr.mxu0 0.0
    %474 = vmatpush1.msra.mxu0 %v441
    %475 = vmatprep.subr.mxu0 0.0
    %476 = vmatpush1.msra.mxu0 %v440
    %477 = vmatprep.subr.mxu0 0.0
    %478 = vmatpush1.msra.mxu0 %v439
    %479 = vmatprep.subr.mxu0 0.0
    %480 = vmatpush1.msra.mxu0 %v438
    %481 = vmatprep.subr.mxu0 0.0
    %482 = vmatpush1.msra.mxu0 %v437
    %483 = vmatprep.subr.mxu0 0.0
    %484 = vmatpush1.msra.mxu0 %v436
    %485 = vmatprep.subr.mxu0 0.0
    %486 = vmatpush1.msra.mxu0 %v435
    %487 = vmatprep.subr.mxu0 0.0
    %488 = vmatpush1.msra.mxu0 %v434
    %489 = vmatprep.subr.mxu0 0.0
    %490 = vmatpush2.msra.mxu0 0.0
    %491 = vmatprep.subr.mxu0 0.0
    %492 = vmatpush2.msra.mxu0 0.0
    %493 = vmatprep.subr.mxu0 0.0
    %494 = vmatpush2.msra.mxu0 0.0
    %495 = vmatprep.subr.mxu0 0.0
    %496 = vmatpush2.msra.mxu0 0.0
    %497 = vmatprep.subr.mxu0 0.0
    %498 = vmatpush2.msra.mxu0 0.0
    %499 = vmatprep.subr.mxu0 0.0
    %500 = vmatpush2.msra.mxu0 0.0
    %501 = vmatprep.subr.mxu0 0.0
    %502 = vmatpush2.msra.mxu0 0.0
    %503 = vmatprep.subr.mxu0 0.0
    %504 = vmatpush2.msra.mxu0 0.0
    %505 = vmatprep.subr.mxu0 0.0
    %506 = vmatpush2.msra.mxu0 0.0
    %507 = vmatprep.subr.mxu0 0.0
    %508 = vmatpush2.msra.mxu0 0.0
    %509 = vmatprep.subr.mxu0 0.0
    %510 = vmatpush2.msra.mxu0 0.0
    %511 = vmatprep.subr.mxu0 0.0
    %512 = vmatpush2.msra.mxu0 0.0
    %513 = vmatprep.subr.mxu0 0.0
    %514 = vmatpush2.msra.mxu0 0.0
    %515 = vmatprep.subr.mxu0 0.0
    %516 = vmatpush2.msra.mxu0 0.0
    %517 = vmatprep.subr.mxu0 0.0
    %518 = vmatpush2.msra.mxu0 0.0
    %519 = vmatprep.subr.mxu0 0.0
    %520 = vmatpush2.msra.mxu0 0.0
    %521 = vmatprep.mubr.f32.mxu0 0.0
    %522 = vmatmul.mubr.f32.gmra.mxu0 %v402
    %v523 = vpop.f32.mrf.mxu0
    %v524 = vadd.f32 %v455, %v523
    %v525 = vpop.f32.mrf.mxu0
    %526 = vmatprep.mubr.f32.mxu0 0.0
    %527 = vmatmul.mubr.f32.gmra.mxu0 %v403
    %v528 = vpop.f32.mrf.mxu0
    %v529 = vadd.f32 %v455, %v528
    %v530 = vpop.f32.mrf.mxu0
    %531 = vmatprep.mubr.f32.mxu0 0.0
    %532 = vmatmul.mubr.f32.gmra.mxu0 %v404
    %v533 = vpop.f32.mrf.mxu0
    %v534 = vadd.f32 %v455, %v533
    %v535 = vpop.f32.mrf.mxu0
    %536 = vmatprep.mubr.f32.mxu0 0.0
    %537 = vmatmul.mubr.f32.gmra.mxu0 %v405
    %v538 = vpop.f32.mrf.mxu0
    %v539 = vadd.f32 %v455, %v538
    %v540 = vpop.f32.mrf.mxu0
    %541 = vmatprep.mubr.f32.mxu0 0.0
    %542 = vmatmul.mubr.f32.gmra.mxu0 %v406
    %v543 = vpop.f32.mrf.mxu0
    %v544 = vadd.f32 %v455, %v543
    %v545 = vpop.f32.mrf.mxu0
    %546 = vmatprep.mubr.f32.mxu0 0.0
    %547 = vmatmul.mubr.f32.gmra.mxu0 %v407
    %v548 = vpop.f32.mrf.mxu0
    %v549 = vadd.f32 %v455, %v548
    %v550 = vpop.f32.mrf.mxu0
    %551 = vmatprep.mubr.f32.mxu0 0.0
    %552 = vmatmul.mubr.f32.gmra.mxu0 %v408
    %v553 = vpop.f32.mrf.mxu0
    %v554 = vadd.f32 %v455, %v553
    %v555 = vpop.f32.mrf.mxu0
    %556 = vmatprep.mubr.f32.mxu0 0.0
    %557 = vmatmul.mubr.f32.gmra.mxu0 %v409
    %v558 = vpop.f32.mrf.mxu0
    %v559 = vadd.f32 %v455, %v558
    %v560 = vpop.f32.mrf.mxu0
    %561 = vmatprep.mubr.f32.mxu0 0.0
    %562 = vmatmul.mubr.f32.gmra.mxu0 %v410
    %v563 = vpop.f32.mrf.mxu0
    %v564 = vadd.f32 %v455, %v563
    %v565 = vpop.f32.mrf.mxu0
    %566 = vmatprep.mubr.f32.mxu0 0.0
    %567 = vmatmul.mubr.f32.gmra.mxu0 %v411
    %v568 = vpop.f32.mrf.mxu0
    %v569 = vadd.f32 %v455, %v568
    %v570 = vpop.f32.mrf.mxu0
    %571 = vmatprep.mubr.f32.mxu0 0.0
    %572 = vmatmul.mubr.f32.gmra.mxu0 %v412
    %v573 = vpop.f32.mrf.mxu0
    %v574 = vadd.f32 %v455, %v573
    %v575 = vpop.f32.mrf.mxu0
    %576 = vmatprep.mubr.f32.mxu0 0.0
    %577 = vmatmul.mubr.f32.gmra.mxu0 %v413
    %v578 = vpop.f32.mrf.mxu0
    %v579 = vadd.f32 %v455, %v578
    %v580 = vpop.f32.mrf.mxu0
    %581 = vmatprep.mubr.f32.mxu0 0.0
    %582 = vmatmul.mubr.f32.gmra.mxu0 %v414
    %v583 = vpop.f32.mrf.mxu0
    %v584 = vadd.f32 %v455, %v583
    %v585 = vpop.f32.mrf.mxu0
    %586 = vmatprep.mubr.f32.mxu0 0.0
    %587 = vmatmul.mubr.f32.gmra.mxu0 %v415
    %v588 = vpop.f32.mrf.mxu0
    %v589 = vadd.f32 %v455, %v588
    %v590 = vpop.f32.mrf.mxu0
    %591 = vmatprep.mubr.f32.mxu0 0.0
    %592 = vmatmul.mubr.f32.gmra.mxu0 %v416
    %v593 = vpop.f32.mrf.mxu0
    %v594 = vadd.f32 %v455, %v593
    %v595 = vpop.f32.mrf.mxu0
    %596 = vmatprep.mubr.f32.mxu0 0.0
    %597 = vmatmul.mubr.f32.gmra.mxu0 %v417
    %v598 = vpop.f32.mrf.mxu0
    %v599 = vadd.f32 %v455, %v598
    %v600 = vpop.f32.mrf.mxu0
    %601 = vmatprep.mubr.f32.mxu0 0.0
    %602 = vmatmul.mubr.f32.gmra.mxu0 %v418
    %v603 = vpop.f32.mrf.mxu0
    %v604 = vadd.f32 %v455, %v603
    %v605 = vpop.f32.mrf.mxu0
    %606 = vmatprep.mubr.f32.mxu0 0.0
    %607 = vmatmul.mubr.f32.gmra.mxu0 %v419
    %v608 = vpop.f32.mrf.mxu0
    %v609 = vadd.f32 %v455, %v608
    %v610 = vpop.f32.mrf.mxu0
    %611 = vmatprep.mubr.f32.mxu0 0.0
    %612 = vmatmul.mubr.f32.gmra.mxu0 %v420
    %v613 = vpop.f32.mrf.mxu0
    %v614 = vadd.f32 %v455, %v613
    %v615 = vpop.f32.mrf.mxu0
    %616 = vmatprep.mubr.f32.mxu0 0.0
    %617 = vmatmul.mubr.f32.gmra.mxu0 %v421
    %v618 = vpop.f32.mrf.mxu0
    %v619 = vadd.f32 %v455, %v618
    %v620 = vpop.f32.mrf.mxu0
    %621 = vmatprep.mubr.f32.mxu0 0.0
    %622 = vmatmul.mubr.f32.gmra.mxu0 %v422
    %v623 = vpop.f32.mrf.mxu0
    %v624 = vadd.f32 %v455, %v623
    %v625 = vpop.f32.mrf.mxu0
    %626 = vmatprep.mubr.f32.mxu0 0.0
    %627 = vmatmul.mubr.f32.gmra.mxu0 %v423
    %v628 = vpop.f32.mrf.mxu0
    %v629 = vadd.f32 %v455, %v628
    %v630 = vpop.f32.mrf.mxu0
    %631 = vmatprep.mubr.f32.mxu0 0.0
    %632 = vmatmul.mubr.f32.gmra.mxu0 %v424
    %v633 = vpop.f32.mrf.mxu0
    %v634 = vadd.f32 %v455, %v633
    %v635 = vpop.f32.mrf.mxu0
    %636 = vmatprep.mubr.f32.mxu0 0.0
    %637 = vmatmul.mubr.f32.gmra.mxu0 %v425
    %v638 = vpop.f32.mrf.mxu0
    %v639 = vadd.f32 %v455, %v638
    %v640 = vpop.f32.mrf.mxu0
    %641 = vmatprep.mubr.f32.mxu0 0.0
    %642 = vmatmul.mubr.f32.gmra.mxu0 %v426
    %v643 = vpop.f32.mrf.mxu0
    %v644 = vadd.f32 %v455, %v643
    %v645 = vpop.f32.mrf.mxu0
    %646 = vmatprep.mubr.f32.mxu0 0.0
    %647 = vmatmul.mubr.f32.gmra.mxu0 %v427
    %v648 = vpop.f32.mrf.mxu0
    %v649 = vadd.f32 %v455, %v648
    %v650 = vpop.f32.mrf.mxu0
    %651 = vmatprep.mubr.f32.mxu0 0.0
    %652 = vmatmul.mubr.f32.gmra.mxu0 %v428
    %v653 = vpop.f32.mrf.mxu0
    %v654 = vadd.f32 %v455, %v653
    %v655 = vpop.f32.mrf.mxu0
    %656 = vmatprep.mubr.f32.mxu0 0.0
    %657 = vmatmul.mubr.f32.gmra.mxu0 %v429
    %v658 = vpop.f32.mrf.mxu0
    %v659 = vadd.f32 %v455, %v658
    %v660 = vpop.f32.mrf.mxu0
    %661 = vmatprep.mubr.f32.mxu0 0.0
    %662 = vmatmul.mubr.f32.gmra.mxu0 %v430
    %v663 = vpop.f32.mrf.mxu0
    %v664 = vadd.f32 %v455, %v663
    %v665 = vpop.f32.mrf.mxu0
    %666 = vmatprep.mubr.f32.mxu0 0.0
    %667 = vmatmul.mubr.f32.gmra.mxu0 %v431
    %v668 = vpop.f32.mrf.mxu0
    %v669 = vadd.f32 %v455, %v668
    %v670 = vpop.f32.mrf.mxu0
    %671 = vmatprep.mubr.f32.mxu0 0.0
    %672 = vmatmul.mubr.f32.gmra.mxu0 %v432
    %v673 = vpop.f32.mrf.mxu0
    %v674 = vadd.f32 %v455, %v673
    %v675 = vpop.f32.mrf.mxu0
    %676 = vmatprep.mubr.f32.mxu0 0.0
    %677 = vmatmul.mubr.f32.gmra.mxu0 %v433
    %v678 = vpop.f32.mrf.mxu0
    %v679 = vadd.f32 %v455, %v678
    %v680 = vpop.f32.mrf.mxu0
    %681 = vdwg.mxu0
    %v682 = vmax.f32 %v524, 0.0
    %v683 = vmax.f32 %v529, 0.0
    %v684 = vmax.f32 %v534, 0.0
    %v685 = vmax.f32 %v539, 0.0
    %v686 = vmax.f32 %v544, 0.0
    %v687 = vmax.f32 %v549, 0.0
    %v688 = vmax.f32 %v554, 0.0
    %v689 = vmax.f32 %v559, 0.0
    %v690 = vmax.f32 %v564, 0.0
    %v691 = vmax.f32 %v569, 0.0
    %v692 = vmax.f32 %v574, 0.0
    %v693 = vmax.f32 %v579, 0.0
    %v694 = vmax.f32 %v584, 0.0
    %v695 = vmax.f32 %v589, 0.0
    %v696 = vmax.f32 %v594, 0.0
    %v697 = vmax.f32 %v599, 0.0
    %v698 = vmax.f32 %v604, 0.0
    %v699 = vmax.f32 %v609, 0.0
    %v700 = vmax.f32 %v614, 0.0
    %v701 = vmax.f32 %v619, 0.0
    %v702 = vmax.f32 %v624, 0.0
    %v703 = vmax.f32 %v629, 0.0
    %v704 = vmax.f32 %v634, 0.0
    %v705 = vmax.f32 %v639, 0.0
    %v706 = vmax.f32 %v644, 0.0
    %v707 = vmax.f32 %v649, 0.0
    %v708 = vmax.f32 %v654, 0.0
    %v709 = vmax.f32 %v659, 0.0
    %v710 = vmax.f32 %v664, 0.0
    %v711 = vmax.f32 %v669, 0.0
    %v712 = vmax.f32 %v674, 0.0
    %v713 = vmax.f32 %v679, 0.0
    %v714 = vld [vmem:[%s5] sm:$0xff]
    %v715 = vld [vmem:[%s5 + $0x8] sm:$0xff]
    %v716 = vld [vmem:[%s5 + $0x10] sm:$0xff]
    %v717 = vld [vmem:[%s5 + $0x18] sm:$0xff]
    %v718 = vld [vmem:[%s5 + $0x20] sm:$0xff]
    %v719 = vld [vmem:[%s5 + $0x28] sm:$0xff]
    %v720 = vld [vmem:[%s5 + $0x30] sm:$0xff]
    %v721 = vld [vmem:[%s5 + $0x38] sm:$0xff]
    %v722 = vld [vmem:[%s6] sm:$0x1]
    %v724 = vlaneseq
    %v725 = vshrl.u32 %v724, 7
    %v726 = vsub.s32 0, %v725
    %v727 = vrot.slane %v722, %v726
    %vm729 = vcmask 523264
    %v731 = vsel %vm729, %v682, 0
    %v734 = vsel %vm729, %v683, 0
    %v737 = vsel %vm729, %v684, 0
    %v740 = vsel %vm729, %v685, 0
    %v743 = vsel %vm729, %v686, 0
    %v746 = vsel %vm729, %v687, 0
    %v749 = vsel %vm729, %v688, 0
    %v752 = vsel %vm729, %v689, 0
    %v755 = vsel %vm729, %v690, 0
    %v758 = vsel %vm729, %v691, 0
    %v761 = vsel %vm729, %v692, 0
    %v764 = vsel %vm729, %v693, 0
    %v767 = vsel %vm729, %v694, 0
    %v770 = vsel %vm729, %v695, 0
    %v773 = vsel %vm729, %v696, 0
    %v776 = vsel %vm729, %v697, 0
    %v779 = vsel %vm729, %v698, 0
    %v782 = vsel %vm729, %v699, 0
    %v785 = vsel %vm729, %v700, 0
    %v788 = vsel %vm729, %v701, 0
    %v791 = vsel %vm729, %v702, 0
    %v794 = vsel %vm729, %v703, 0
    %v797 = vsel %vm729, %v704, 0
    %v800 = vsel %vm729, %v705, 0
    %v803 = vsel %vm729, %v706, 0
    %v806 = vsel %vm729, %v707, 0
    %v809 = vsel %vm729, %v708, 0
    %v812 = vsel %vm729, %v709, 0
    %v815 = vsel %vm729, %v710, 0
    %v818 = vsel %vm729, %v711, 0
    %v821 = vsel %vm729, %v712, 0
    %v824 = vsel %vm729, %v713, 0
    %826 = vmatprep.subr.mxu0 0.0
    %827 = vmatpush1.msra.mxu0 0.0
    %828 = vmatprep.subr.mxu0 0.0
    %829 = vmatpush1.msra.mxu0 0.0
    %830 = vmatprep.subr.mxu0 0.0
    %831 = vmatpush1.msra.mxu0 0.0
    %832 = vmatprep.subr.mxu0 0.0
    %833 = vmatpush1.msra.mxu0 0.0
    %834 = vmatprep.subr.mxu0 0.0
    %835 = vmatpush1.msra.mxu0 0.0
    %836 = vmatprep.subr.mxu0 0.0
    %837 = vmatpush1.msra.mxu0 0.0
    %838 = vmatprep.subr.mxu0 0.0
    %839 = vmatpush1.msra.mxu0 0.0
    %840 = vmatprep.subr.mxu0 0.0
    %841 = vmatpush1.msra.mxu0 0.0
    %842 = vmatprep.subr.mxu0 0.0
    %843 = vmatpush1.msra.mxu0 %v721
    %844 = vmatprep.subr.mxu0 0.0
    %845 = vmatpush1.msra.mxu0 %v720
    %846 = vmatprep.subr.mxu0 0.0
    %847 = vmatpush1.msra.mxu0 %v719
    %848 = vmatprep.subr.mxu0 0.0
    %849 = vmatpush1.msra.mxu0 %v718
    %850 = vmatprep.subr.mxu0 0.0
    %851 = vmatpush1.msra.mxu0 %v717
    %852 = vmatprep.subr.mxu0 0.0
    %853 = vmatpush1.msra.mxu0 %v716
    %854 = vmatprep.subr.mxu0 0.0
    %855 = vmatpush1.msra.mxu0 %v715
    %856 = vmatprep.subr.mxu0 0.0
    %857 = vmatpush1.msra.mxu0 %v714
    %858 = vmatprep.subr.mxu0 0.0
    %859 = vmatpush2.msra.mxu0 0.0
    %860 = vmatprep.subr.mxu0 0.0
    %861 = vmatpush2.msra.mxu0 0.0
    %862 = vmatprep.subr.mxu0 0.0
    %863 = vmatpush2.msra.mxu0 0.0
    %864 = vmatprep.subr.mxu0 0.0
    %865 = vmatpush2.msra.mxu0 0.0
    %866 = vmatprep.subr.mxu0 0.0
    %867 = vmatpush2.msra.mxu0 0.0
    %868 = vmatprep.subr.mxu0 0.0
    %869 = vmatpush2.msra.mxu0 0.0
    %870 = vmatprep.subr.mxu0 0.0
    %871 = vmatpush2.msra.mxu0 0.0
    %872 = vmatprep.subr.mxu0 0.0
    %873 = vmatpush2.msra.mxu0 0.0
    %874 = vmatprep.subr.mxu0 0.0
    %875 = vmatpush2.msra.mxu0 0.0
    %876 = vmatprep.subr.mxu0 0.0
    %877 = vmatpush2.msra.mxu0 0.0
    %878 = vmatprep.subr.mxu0 0.0
    %879 = vmatpush2.msra.mxu0 0.0
    %880 = vmatprep.subr.mxu0 0.0
    %881 = vmatpush2.msra.mxu0 0.0
    %882 = vmatprep.subr.mxu0 0.0
    %883 = vmatpush2.msra.mxu0 0.0
    %884 = vmatprep.subr.mxu0 0.0
    %885 = vmatpush2.msra.mxu0 0.0
    %886 = vmatprep.subr.mxu0 0.0
    %887 = vmatpush2.msra.mxu0 0.0
    %888 = vmatprep.subr.mxu0 0.0
    %889 = vmatpush2.msra.mxu0 0.0
    %890 = vmatprep.mubr.f32.mxu0 0.0
    %891 = vmatmul.mubr.f32.gmra.mxu0 %v731
    %v892 = vpop.f32.mrf.mxu0
    %v893 = vadd.f32 %v727, %v892
    %v894 = vpop.f32.mrf.mxu0
    %895 = vmatprep.mubr.f32.mxu0 0.0
    %896 = vmatmul.mubr.f32.gmra.mxu0 %v734
    %v897 = vpop.f32.mrf.mxu0
    %v898 = vadd.f32 %v727, %v897
    %v899 = vpop.f32.mrf.mxu0
    %900 = vmatprep.mubr.f32.mxu0 0.0
    %901 = vmatmul.mubr.f32.gmra.mxu0 %v737
    %v902 = vpop.f32.mrf.mxu0
    %v903 = vadd.f32 %v727, %v902
    %v904 = vpop.f32.mrf.mxu0
    %905 = vmatprep.mubr.f32.mxu0 0.0
    %906 = vmatmul.mubr.f32.gmra.mxu0 %v740
    %v907 = vpop.f32.mrf.mxu0
    %v908 = vadd.f32 %v727, %v907
    %v909 = vpop.f32.mrf.mxu0
    %910 = vmatprep.mubr.f32.mxu0 0.0
    %911 = vmatmul.mubr.f32.gmra.mxu0 %v743
    %v912 = vpop.f32.mrf.mxu0
    %v913 = vadd.f32 %v727, %v912
    %v914 = vpop.f32.mrf.mxu0
    %915 = vmatprep.mubr.f32.mxu0 0.0
    %916 = vmatmul.mubr.f32.gmra.mxu0 %v746
    %v917 = vpop.f32.mrf.mxu0
    %v918 = vadd.f32 %v727, %v917
    %v919 = vpop.f32.mrf.mxu0
    %920 = vmatprep.mubr.f32.mxu0 0.0
    %921 = vmatmul.mubr.f32.gmra.mxu0 %v749
    %v922 = vpop.f32.mrf.mxu0
    %v923 = vadd.f32 %v727, %v922
    %v924 = vpop.f32.mrf.mxu0
    %925 = vmatprep.mubr.f32.mxu0 0.0
    %926 = vmatmul.mubr.f32.gmra.mxu0 %v752
    %v927 = vpop.f32.mrf.mxu0
    %v928 = vadd.f32 %v727, %v927
    %v929 = vpop.f32.mrf.mxu0
    %930 = vmatprep.mubr.f32.mxu0 0.0
    %931 = vmatmul.mubr.f32.gmra.mxu0 %v755
    %v932 = vpop.f32.mrf.mxu0
    %v933 = vadd.f32 %v727, %v932
    %v934 = vpop.f32.mrf.mxu0
    %935 = vmatprep.mubr.f32.mxu0 0.0
    %936 = vmatmul.mubr.f32.gmra.mxu0 %v758
    %v937 = vpop.f32.mrf.mxu0
    %v938 = vadd.f32 %v727, %v937
    %v939 = vpop.f32.mrf.mxu0
    %940 = vmatprep.mubr.f32.mxu0 0.0
    %941 = vmatmul.mubr.f32.gmra.mxu0 %v761
    %v942 = vpop.f32.mrf.mxu0
    %v943 = vadd.f32 %v727, %v942
    %v944 = vpop.f32.mrf.mxu0
    %945 = vmatprep.mubr.f32.mxu0 0.0
    %946 = vmatmul.mubr.f32.gmra.mxu0 %v764
    %v947 = vpop.f32.mrf.mxu0
    %v948 = vadd.f32 %v727, %v947
    %v949 = vpop.f32.mrf.mxu0
    %950 = vmatprep.mubr.f32.mxu0 0.0
    %951 = vmatmul.mubr.f32.gmra.mxu0 %v767
    %v952 = vpop.f32.mrf.mxu0
    %v953 = vadd.f32 %v727, %v952
    %v954 = vpop.f32.mrf.mxu0
    %955 = vmatprep.mubr.f32.mxu0 0.0
    %956 = vmatmul.mubr.f32.gmra.mxu0 %v770
    %v957 = vpop.f32.mrf.mxu0
    %v958 = vadd.f32 %v727, %v957
    %v959 = vpop.f32.mrf.mxu0
    %960 = vmatprep.mubr.f32.mxu0 0.0
    %961 = vmatmul.mubr.f32.gmra.mxu0 %v773
    %v962 = vpop.f32.mrf.mxu0
    %v963 = vadd.f32 %v727, %v962
    %v964 = vpop.f32.mrf.mxu0
    %965 = vmatprep.mubr.f32.mxu0 0.0
    %966 = vmatmul.mubr.f32.gmra.mxu0 %v776
    %v967 = vpop.f32.mrf.mxu0
    %v968 = vadd.f32 %v727, %v967
    %v969 = vpop.f32.mrf.mxu0
    %970 = vmatprep.mubr.f32.mxu0 0.0
    %971 = vmatmul.mubr.f32.gmra.mxu0 %v779
    %v972 = vpop.f32.mrf.mxu0
    %v973 = vadd.f32 %v727, %v972
    %v974 = vpop.f32.mrf.mxu0
    %975 = vmatprep.mubr.f32.mxu0 0.0
    %976 = vmatmul.mubr.f32.gmra.mxu0 %v782
    %v977 = vpop.f32.mrf.mxu0
    %v978 = vadd.f32 %v727, %v977
    %v979 = vpop.f32.mrf.mxu0
    %980 = vmatprep.mubr.f32.mxu0 0.0
    %981 = vmatmul.mubr.f32.gmra.mxu0 %v785
    %v982 = vpop.f32.mrf.mxu0
    %v983 = vadd.f32 %v727, %v982
    %v984 = vpop.f32.mrf.mxu0
    %985 = vmatprep.mubr.f32.mxu0 0.0
    %986 = vmatmul.mubr.f32.gmra.mxu0 %v788
    %v987 = vpop.f32.mrf.mxu0
    %v988 = vadd.f32 %v727, %v987
    %v989 = vpop.f32.mrf.mxu0
    %990 = vmatprep.mubr.f32.mxu0 0.0
    %991 = vmatmul.mubr.f32.gmra.mxu0 %v791
    %v992 = vpop.f32.mrf.mxu0
    %v993 = vadd.f32 %v727, %v992
    %v994 = vpop.f32.mrf.mxu0
    %995 = vmatprep.mubr.f32.mxu0 0.0
    %996 = vmatmul.mubr.f32.gmra.mxu0 %v794
    %v997 = vpop.f32.mrf.mxu0
    %v998 = vadd.f32 %v727, %v997
    %v999 = vpop.f32.mrf.mxu0
    %1000 = vmatprep.mubr.f32.mxu0 0.0
    %1001 = vmatmul.mubr.f32.gmra.mxu0 %v797
    %v1002 = vpop.f32.mrf.mxu0
    %v1003 = vadd.f32 %v727, %v1002
    %v1004 = vpop.f32.mrf.mxu0
    %1005 = vmatprep.mubr.f32.mxu0 0.0
    %1006 = vmatmul.mubr.f32.gmra.mxu0 %v800
    %v1007 = vpop.f32.mrf.mxu0
    %v1008 = vadd.f32 %v727, %v1007
    %v1009 = vpop.f32.mrf.mxu0
    %1010 = vmatprep.mubr.f32.mxu0 0.0
    %1011 = vmatmul.mubr.f32.gmra.mxu0 %v803
    %v1012 = vpop.f32.mrf.mxu0
    %v1013 = vadd.f32 %v727, %v1012
    %v1014 = vpop.f32.mrf.mxu0
    %1015 = vmatprep.mubr.f32.mxu0 0.0
    %1016 = vmatmul.mubr.f32.gmra.mxu0 %v806
    %v1017 = vpop.f32.mrf.mxu0
    %v1018 = vadd.f32 %v727, %v1017
    %v1019 = vpop.f32.mrf.mxu0
    %1020 = vmatprep.mubr.f32.mxu0 0.0
    %1021 = vmatmul.mubr.f32.gmra.mxu0 %v809
    %v1022 = vpop.f32.mrf.mxu0
    %v1023 = vadd.f32 %v727, %v1022
    %v1024 = vpop.f32.mrf.mxu0
    %1025 = vmatprep.mubr.f32.mxu0 0.0
    %1026 = vmatmul.mubr.f32.gmra.mxu0 %v812
    %v1027 = vpop.f32.mrf.mxu0
    %v1028 = vadd.f32 %v727, %v1027
    %v1029 = vpop.f32.mrf.mxu0
    %1030 = vmatprep.mubr.f32.mxu0 0.0
    %1031 = vmatmul.mubr.f32.gmra.mxu0 %v815
    %v1032 = vpop.f32.mrf.mxu0
    %v1033 = vadd.f32 %v727, %v1032
    %v1034 = vpop.f32.mrf.mxu0
    %1035 = vmatprep.mubr.f32.mxu0 0.0
    %1036 = vmatmul.mubr.f32.gmra.mxu0 %v818
    %v1037 = vpop.f32.mrf.mxu0
    %v1038 = vadd.f32 %v727, %v1037
    %v1039 = vpop.f32.mrf.mxu0
    %1040 = vmatprep.mubr.f32.mxu0 0.0
    %1041 = vmatmul.mubr.f32.gmra.mxu0 %v821
    %v1042 = vpop.f32.mrf.mxu0
    %v1043 = vadd.f32 %v727, %v1042
    %v1044 = vpop.f32.mrf.mxu0
    %1045 = vmatprep.mubr.f32.mxu0 0.0
    %1046 = vmatmul.mubr.f32.gmra.mxu0 %v824
    %v1047 = vpop.f32.mrf.mxu0
    %v1048 = vadd.f32 %v727, %v1047
    %v1049 = vpop.f32.mrf.mxu0
    %1050 = vdwg.mxu0
    %v1051 = vmax.f32 %v893, 0.0
    %v1052 = vmax.f32 %v898, 0.0
    %v1053 = vmax.f32 %v903, 0.0
    %v1054 = vmax.f32 %v908, 0.0
    %v1055 = vmax.f32 %v913, 0.0
    %v1056 = vmax.f32 %v918, 0.0
    %v1057 = vmax.f32 %v923, 0.0
    %v1058 = vmax.f32 %v928, 0.0
    %v1059 = vmax.f32 %v933, 0.0
    %v1060 = vmax.f32 %v938, 0.0
    %v1061 = vmax.f32 %v943, 0.0
    %v1062 = vmax.f32 %v948, 0.0
    %v1063 = vmax.f32 %v953, 0.0
    %v1064 = vmax.f32 %v958, 0.0
    %v1065 = vmax.f32 %v963, 0.0
    %v1066 = vmax.f32 %v968, 0.0
    %v1067 = vmax.f32 %v973, 0.0
    %v1068 = vmax.f32 %v978, 0.0
    %v1069 = vmax.f32 %v983, 0.0
    %v1070 = vmax.f32 %v988, 0.0
    %v1071 = vmax.f32 %v993, 0.0
    %v1072 = vmax.f32 %v998, 0.0
    %v1073 = vmax.f32 %v1003, 0.0
    %v1074 = vmax.f32 %v1008, 0.0
    %v1075 = vmax.f32 %v1013, 0.0
    %v1076 = vmax.f32 %v1018, 0.0
    %v1077 = vmax.f32 %v1023, 0.0
    %v1078 = vmax.f32 %v1028, 0.0
    %v1079 = vmax.f32 %v1033, 0.0
    %v1080 = vmax.f32 %v1038, 0.0
    %v1081 = vmax.f32 %v1043, 0.0
    %v1082 = vmax.f32 %v1048, 0.0
    %v1083 = vld [vmem:[#allocation7] sm:$0xff]
    %v1084 = vld [vmem:[#allocation7 + $0x8] sm:$0xff]
    %v1085 = vld [vmem:[#allocation7 + $0x10] sm:$0xff]
    %v1086 = vld [vmem:[#allocation7 + $0x18] sm:$0xff]
    %v1087 = vld [vmem:[#allocation7 + $0x20] sm:$0xff]
    %v1088 = vld [vmem:[#allocation7 + $0x28] sm:$0xff]
    %v1089 = vld [vmem:[#allocation7 + $0x30] sm:$0xff]
    %v1090 = vld [vmem:[#allocation7 + $0x38] sm:$0xff]
    %v1091 = vld [vmem:[#allocation7 + $0x40] sm:$0xff]
    %v1092 = vld [vmem:[#allocation7 + $0x48] sm:$0xff]
    %v1093 = vld [vmem:[#allocation7 + $0x50] sm:$0xff]
    %v1094 = vld [vmem:[#allocation7 + $0x58] sm:$0xff]
    %v1095 = vld [vmem:[#allocation7 + $0x60] sm:$0xff]
    %v1096 = vld [vmem:[#allocation7 + $0x68] sm:$0xff]
    %v1097 = vld [vmem:[#allocation7 + $0x70] sm:$0xff]
    %v1098 = vld [vmem:[#allocation7 + $0x78] sm:$0xff]
    %v1099 = vld [vmem:[#allocation7 + $0x80] sm:$0xff]
    %v1100 = vld [vmem:[#allocation7 + $0x88] sm:$0xff]
    %v1101 = vld [vmem:[#allocation7 + $0x90] sm:$0xff]
    %v1102 = vld [vmem:[#allocation7 + $0x98] sm:$0xff]
    %v1103 = vld [vmem:[#allocation7 + $0xa0] sm:$0xff]
    %v1104 = vld [vmem:[#allocation7 + $0xa8] sm:$0xff]
    %v1105 = vld [vmem:[#allocation7 + $0xb0] sm:$0xff]
    %v1106 = vld [vmem:[#allocation7 + $0xb8] sm:$0xff]
    %v1107 = vld [vmem:[#allocation7 + $0xc0] sm:$0xff]
    %v1108 = vld [vmem:[#allocation7 + $0xc8] sm:$0xff]
    %v1109 = vld [vmem:[#allocation7 + $0xd0] sm:$0xff]
    %v1110 = vld [vmem:[#allocation7 + $0xd8] sm:$0xff]
    %v1111 = vld [vmem:[#allocation7 + $0xe0] sm:$0xff]
    %v1112 = vld [vmem:[#allocation7 + $0xe8] sm:$0xff]
    %v1113 = vld [vmem:[#allocation7 + $0xf0] sm:$0xff]
    %v1114 = vld [vmem:[#allocation7 + $0xf8] sm:$0xff]
    %v1115 = vld [vmem:[%s8] sm:$0x3]
    %v1117 = vlaneseq
    %v1118 = vshrl.u32 %v1117, 7
    %v1119 = vsub.s32 0, %v1118
    %v1120 = vrot.slane %v1115, %v1119
    %v1121 = vlaneseq
    %v1122 = vshrl.u32 %v1121, 7
    %v1123 = vsub.s32 1, %v1122
    %v1124 = vrot.slane %v1115, %v1123
    %1127 = vmatprep.subr.mxu0 %v1114
    %1128 = vmatpush1.msra.mxu0 %v1113
    %1129 = vmatprep.subr.mxu0 %v1112
    %1130 = vmatpush1.msra.mxu0 %v1111
    %1131 = vmatprep.subr.mxu0 %v1110
    %1132 = vmatpush1.msra.mxu0 %v1109
    %1133 = vmatprep.subr.mxu0 %v1108
    %1134 = vmatpush1.msra.mxu0 %v1107
    %1135 = vmatprep.subr.mxu0 %v1106
    %1136 = vmatpush1.msra.mxu0 %v1105
    %1137 = vmatprep.subr.mxu0 %v1104
    %1138 = vmatpush1.msra.mxu0 %v1103
    %1139 = vmatprep.subr.mxu0 %v1102
    %1140 = vmatpush1.msra.mxu0 %v1101
    %1141 = vmatprep.subr.mxu0 %v1100
    %1142 = vmatpush1.msra.mxu0 %v1099
    %1143 = vmatprep.subr.mxu0 %v1098
    %1144 = vmatpush1.msra.mxu0 %v1097
    %1145 = vmatprep.subr.mxu0 %v1096
    %1146 = vmatpush1.msra.mxu0 %v1095
    %1147 = vmatprep.subr.mxu0 %v1094
    %1148 = vmatpush1.msra.mxu0 %v1093
    %1149 = vmatprep.subr.mxu0 %v1092
    %1150 = vmatpush1.msra.mxu0 %v1091
    %1151 = vmatprep.subr.mxu0 %v1090
    %1152 = vmatpush1.msra.mxu0 %v1089
    %1153 = vmatprep.subr.mxu0 %v1088
    %1154 = vmatpush1.msra.mxu0 %v1087
    %1155 = vmatprep.subr.mxu0 %v1086
    %1156 = vmatpush1.msra.mxu0 %v1085
    %1157 = vmatprep.subr.mxu0 %v1084
    %1158 = vmatpush1.msra.mxu0 %v1083
    %1159 = vmatprep.subr.mxu0 0.0
    %1160 = vmatpush2.msra.mxu0 0.0
    %1161 = vmatprep.subr.mxu0 0.0
    %1162 = vmatpush2.msra.mxu0 0.0
    %1163 = vmatprep.subr.mxu0 0.0
    %1164 = vmatpush2.msra.mxu0 0.0
    %1165 = vmatprep.subr.mxu0 0.0
    %1166 = vmatpush2.msra.mxu0 0.0
    %1167 = vmatprep.subr.mxu0 0.0
    %1168 = vmatpush2.msra.mxu0 0.0
    %1169 = vmatprep.subr.mxu0 0.0
    %1170 = vmatpush2.msra.mxu0 0.0
    %1171 = vmatprep.subr.mxu0 0.0
    %1172 = vmatpush2.msra.mxu0 0.0
    %1173 = vmatprep.subr.mxu0 0.0
    %1174 = vmatpush2.msra.mxu0 0.0
    %1175 = vmatprep.subr.mxu0 0.0
    %1176 = vmatpush2.msra.mxu0 0.0
    %1177 = vmatprep.subr.mxu0 0.0
    %1178 = vmatpush2.msra.mxu0 0.0
    %1179 = vmatprep.subr.mxu0 0.0
    %1180 = vmatpush2.msra.mxu0 0.0
    %1181 = vmatprep.subr.mxu0 0.0
    %1182 = vmatpush2.msra.mxu0 0.0
    %1183 = vmatprep.subr.mxu0 0.0
    %1184 = vmatpush2.msra.mxu0 0.0
    %1185 = vmatprep.subr.mxu0 0.0
    %1186 = vmatpush2.msra.mxu0 0.0
    %1187 = vmatprep.subr.mxu0 0.0
    %1188 = vmatpush2.msra.mxu0 0.0
    %1189 = vmatprep.subr.mxu0 0.0
    %1190 = vmatpush2.msra.mxu0 0.0
    %1191 = vmatprep.mubr.f32.mxu0 0.0
    %1192 = vmatmul.mubr.f32.gmra.mxu0 %v1051
    %v1193 = vpop.f32.mrf.mxu0
    %v1194 = vadd.f32 %v1120, %v1193
    %v1195 = vpop.f32.mrf.mxu0
    %v1196 = vadd.f32 %v1124, %v1195
    %1197 = vmatprep.mubr.f32.mxu0 0.0
    %1198 = vmatmul.mubr.f32.gmra.mxu0 %v1052
    %v1199 = vpop.f32.mrf.mxu0
    %v1200 = vadd.f32 %v1120, %v1199
    %v1201 = vpop.f32.mrf.mxu0
    %v1202 = vadd.f32 %v1124, %v1201
    %1203 = vmatprep.mubr.f32.mxu0 0.0
    %1204 = vmatmul.mubr.f32.gmra.mxu0 %v1053
    %v1205 = vpop.f32.mrf.mxu0
    %v1206 = vadd.f32 %v1120, %v1205
    %v1207 = vpop.f32.mrf.mxu0
    %v1208 = vadd.f32 %v1124, %v1207
    %1209 = vmatprep.mubr.f32.mxu0 0.0
    %1210 = vmatmul.mubr.f32.gmra.mxu0 %v1054
    %v1211 = vpop.f32.mrf.mxu0
    %v1212 = vadd.f32 %v1120, %v1211
    %v1213 = vpop.f32.mrf.mxu0
    %v1214 = vadd.f32 %v1124, %v1213
    %1215 = vmatprep.mubr.f32.mxu0 0.0
    %1216 = vmatmul.mubr.f32.gmra.mxu0 %v1055
    %v1217 = vpop.f32.mrf.mxu0
    %v1218 = vadd.f32 %v1120, %v1217
    %v1219 = vpop.f32.mrf.mxu0
    %v1220 = vadd.f32 %v1124, %v1219
    %1221 = vmatprep.mubr.f32.mxu0 0.0
    %1222 = vmatmul.mubr.f32.gmra.mxu0 %v1056
    %v1223 = vpop.f32.mrf.mxu0
    %v1224 = vadd.f32 %v1120, %v1223
    %v1225 = vpop.f32.mrf.mxu0
    %v1226 = vadd.f32 %v1124, %v1225
    %1227 = vmatprep.mubr.f32.mxu0 0.0
    %1228 = vmatmul.mubr.f32.gmra.mxu0 %v1057
    %v1229 = vpop.f32.mrf.mxu0
    %v1230 = vadd.f32 %v1120, %v1229
    %v1231 = vpop.f32.mrf.mxu0
    %v1232 = vadd.f32 %v1124, %v1231
    %1233 = vmatprep.mubr.f32.mxu0 0.0
    %1234 = vmatmul.mubr.f32.gmra.mxu0 %v1058
    %v1235 = vpop.f32.mrf.mxu0
    %v1236 = vadd.f32 %v1120, %v1235
    %v1237 = vpop.f32.mrf.mxu0
    %v1238 = vadd.f32 %v1124, %v1237
    %1239 = vmatprep.mubr.f32.mxu0 0.0
    %1240 = vmatmul.mubr.f32.gmra.mxu0 %v1059
    %v1241 = vpop.f32.mrf.mxu0
    %v1242 = vadd.f32 %v1120, %v1241
    %v1243 = vpop.f32.mrf.mxu0
    %v1244 = vadd.f32 %v1124, %v1243
    %1245 = vmatprep.mubr.f32.mxu0 0.0
    %1246 = vmatmul.mubr.f32.gmra.mxu0 %v1060
    %v1247 = vpop.f32.mrf.mxu0
    %v1248 = vadd.f32 %v1120, %v1247
    %v1249 = vpop.f32.mrf.mxu0
    %v1250 = vadd.f32 %v1124, %v1249
    %1251 = vmatprep.mubr.f32.mxu0 0.0
    %1252 = vmatmul.mubr.f32.gmra.mxu0 %v1061
    %v1253 = vpop.f32.mrf.mxu0
    %v1254 = vadd.f32 %v1120, %v1253
    %v1255 = vpop.f32.mrf.mxu0
    %v1256 = vadd.f32 %v1124, %v1255
    %1257 = vmatprep.mubr.f32.mxu0 0.0
    %1258 = vmatmul.mubr.f32.gmra.mxu0 %v1062
    %v1259 = vpop.f32.mrf.mxu0
    %v1260 = vadd.f32 %v1120, %v1259
    %v1261 = vpop.f32.mrf.mxu0
    %v1262 = vadd.f32 %v1124, %v1261
    %1263 = vmatprep.mubr.f32.mxu0 0.0
    %1264 = vmatmul.mubr.f32.gmra.mxu0 %v1063
    %v1265 = vpop.f32.mrf.mxu0
    %v1266 = vadd.f32 %v1120, %v1265
    %v1267 = vpop.f32.mrf.mxu0
    %v1268 = vadd.f32 %v1124, %v1267
    %1269 = vmatprep.mubr.f32.mxu0 0.0
    %1270 = vmatmul.mubr.f32.gmra.mxu0 %v1064
    %v1271 = vpop.f32.mrf.mxu0
    %v1272 = vadd.f32 %v1120, %v1271
    %v1273 = vpop.f32.mrf.mxu0
    %v1274 = vadd.f32 %v1124, %v1273
    %1275 = vmatprep.mubr.f32.mxu0 0.0
    %1276 = vmatmul.mubr.f32.gmra.mxu0 %v1065
    %v1277 = vpop.f32.mrf.mxu0
    %v1278 = vadd.f32 %v1120, %v1277
    %v1279 = vpop.f32.mrf.mxu0
    %v1280 = vadd.f32 %v1124, %v1279
    %1281 = vmatprep.mubr.f32.mxu0 0.0
    %1282 = vmatmul.mubr.f32.gmra.mxu0 %v1066
    %v1283 = vpop.f32.mrf.mxu0
    %v1284 = vadd.f32 %v1120, %v1283
    %v1285 = vpop.f32.mrf.mxu0
    %v1286 = vadd.f32 %v1124, %v1285
    %1287 = vmatprep.mubr.f32.mxu0 0.0
    %1288 = vmatmul.mubr.f32.gmra.mxu0 %v1067
    %v1289 = vpop.f32.mrf.mxu0
    %v1290 = vadd.f32 %v1120, %v1289
    %v1291 = vpop.f32.mrf.mxu0
    %v1292 = vadd.f32 %v1124, %v1291
    %1293 = vmatprep.mubr.f32.mxu0 0.0
    %1294 = vmatmul.mubr.f32.gmra.mxu0 %v1068
    %v1295 = vpop.f32.mrf.mxu0
    %v1296 = vadd.f32 %v1120, %v1295
    %v1297 = vpop.f32.mrf.mxu0
    %v1298 = vadd.f32 %v1124, %v1297
    %1299 = vmatprep.mubr.f32.mxu0 0.0
    %1300 = vmatmul.mubr.f32.gmra.mxu0 %v1069
    %v1301 = vpop.f32.mrf.mxu0
    %v1302 = vadd.f32 %v1120, %v1301
    %v1303 = vpop.f32.mrf.mxu0
    %v1304 = vadd.f32 %v1124, %v1303
    %1305 = vmatprep.mubr.f32.mxu0 0.0
    %1306 = vmatmul.mubr.f32.gmra.mxu0 %v1070
    %v1307 = vpop.f32.mrf.mxu0
    %v1308 = vadd.f32 %v1120, %v1307
    %v1309 = vpop.f32.mrf.mxu0
    %v1310 = vadd.f32 %v1124, %v1309
    %1311 = vmatprep.mubr.f32.mxu0 0.0
    %1312 = vmatmul.mubr.f32.gmra.mxu0 %v1071
    %v1313 = vpop.f32.mrf.mxu0
    %v1314 = vadd.f32 %v1120, %v1313
    %v1315 = vpop.f32.mrf.mxu0
    %v1316 = vadd.f32 %v1124, %v1315
    %1317 = vmatprep.mubr.f32.mxu0 0.0
    %1318 = vmatmul.mubr.f32.gmra.mxu0 %v1072
    %v1319 = vpop.f32.mrf.mxu0
    %v1320 = vadd.f32 %v1120, %v1319
    %v1321 = vpop.f32.mrf.mxu0
    %v1322 = vadd.f32 %v1124, %v1321
    %1323 = vmatprep.mubr.f32.mxu0 0.0
    %1324 = vmatmul.mubr.f32.gmra.mxu0 %v1073
    %v1325 = vpop.f32.mrf.mxu0
    %v1326 = vadd.f32 %v1120, %v1325
    %v1327 = vpop.f32.mrf.mxu0
    %v1328 = vadd.f32 %v1124, %v1327
    %1329 = vmatprep.mubr.f32.mxu0 0.0
    %1330 = vmatmul.mubr.f32.gmra.mxu0 %v1074
    %v1331 = vpop.f32.mrf.mxu0
    %v1332 = vadd.f32 %v1120, %v1331
    %v1333 = vpop.f32.mrf.mxu0
    %v1334 = vadd.f32 %v1124, %v1333
    %1335 = vmatprep.mubr.f32.mxu0 0.0
    %1336 = vmatmul.mubr.f32.gmra.mxu0 %v1075
    %v1337 = vpop.f32.mrf.mxu0
    %v1338 = vadd.f32 %v1120, %v1337
    %v1339 = vpop.f32.mrf.mxu0
    %v1340 = vadd.f32 %v1124, %v1339
    %1341 = vmatprep.mubr.f32.mxu0 0.0
    %1342 = vmatmul.mubr.f32.gmra.mxu0 %v1076
    %v1343 = vpop.f32.mrf.mxu0
    %v1344 = vadd.f32 %v1120, %v1343
    %v1345 = vpop.f32.mrf.mxu0
    %v1346 = vadd.f32 %v1124, %v1345
    %1347 = vmatprep.mubr.f32.mxu0 0.0
    %1348 = vmatmul.mubr.f32.gmra.mxu0 %v1077
    %v1349 = vpop.f32.mrf.mxu0
    %v1350 = vadd.f32 %v1120, %v1349
    %v1351 = vpop.f32.mrf.mxu0
    %v1352 = vadd.f32 %v1124, %v1351
    %1353 = vmatprep.mubr.f32.mxu0 0.0
    %1354 = vmatmul.mubr.f32.gmra.mxu0 %v1078
    %v1355 = vpop.f32.mrf.mxu0
    %v1356 = vadd.f32 %v1120, %v1355
    %v1357 = vpop.f32.mrf.mxu0
    %v1358 = vadd.f32 %v1124, %v1357
    %1359 = vmatprep.mubr.f32.mxu0 0.0
    %1360 = vmatmul.mubr.f32.gmra.mxu0 %v1079
    %v1361 = vpop.f32.mrf.mxu0
    %v1362 = vadd.f32 %v1120, %v1361
    %v1363 = vpop.f32.mrf.mxu0
    %v1364 = vadd.f32 %v1124, %v1363
    %1365 = vmatprep.mubr.f32.mxu0 0.0
    %1366 = vmatmul.mubr.f32.gmra.mxu0 %v1080
    %v1367 = vpop.f32.mrf.mxu0
    %v1368 = vadd.f32 %v1120, %v1367
    %v1369 = vpop.f32.mrf.mxu0
    %v1370 = vadd.f32 %v1124, %v1369
    %1371 = vmatprep.mubr.f32.mxu0 0.0
    %1372 = vmatmul.mubr.f32.gmra.mxu0 %v1081
    %v1373 = vpop.f32.mrf.mxu0
    %v1374 = vadd.f32 %v1120, %v1373
    %v1375 = vpop.f32.mrf.mxu0
    %v1376 = vadd.f32 %v1124, %v1375
    %1377 = vmatprep.mubr.f32.mxu0 0.0
    %1378 = vmatmul.mubr.f32.gmra.mxu0 %v1082
    %v1379 = vpop.f32.mrf.mxu0
    %v1380 = vadd.f32 %v1120, %v1379
    %v1381 = vpop.f32.mrf.mxu0
    %v1382 = vadd.f32 %v1124, %v1381
    %1383 = vdwg.mxu0
    %v1384 = vxor.u32 %v1194, 2147483648
    %v1385 = vxor.u32 %v1196, 2147483648
    %v1386 = vxor.u32 %v1200, 2147483648
    %v1387 = vxor.u32 %v1202, 2147483648
    %v1388 = vxor.u32 %v1206, 2147483648
    %v1389 = vxor.u32 %v1208, 2147483648
    %v1390 = vxor.u32 %v1212, 2147483648
    %v1391 = vxor.u32 %v1214, 2147483648
    %v1392 = vxor.u32 %v1218, 2147483648
    %v1393 = vxor.u32 %v1220, 2147483648
    %v1394 = vxor.u32 %v1224, 2147483648
    %v1395 = vxor.u32 %v1226, 2147483648
    %v1396 = vxor.u32 %v1230, 2147483648
    %v1397 = vxor.u32 %v1232, 2147483648
    %v1398 = vxor.u32 %v1236, 2147483648
    %v1399 = vxor.u32 %v1238, 2147483648
    %v1400 = vxor.u32 %v1242, 2147483648
    %v1401 = vxor.u32 %v1244, 2147483648
    %v1402 = vxor.u32 %v1248, 2147483648
    %v1403 = vxor.u32 %v1250, 2147483648
    %v1404 = vxor.u32 %v1254, 2147483648
    %v1405 = vxor.u32 %v1256, 2147483648
    %v1406 = vxor.u32 %v1260, 2147483648
    %v1407 = vxor.u32 %v1262, 2147483648
    %v1408 = vxor.u32 %v1266, 2147483648
    %v1409 = vxor.u32 %v1268, 2147483648
    %v1410 = vxor.u32 %v1272, 2147483648
    %v1411 = vxor.u32 %v1274, 2147483648
    %v1412 = vxor.u32 %v1278, 2147483648
    %v1413 = vxor.u32 %v1280, 2147483648
    %v1414 = vxor.u32 %v1284, 2147483648
    %v1415 = vxor.u32 %v1286, 2147483648
    %v1416 = vxor.u32 %v1290, 2147483648
    %v1417 = vxor.u32 %v1292, 2147483648
    %v1418 = vxor.u32 %v1296, 2147483648
    %v1419 = vxor.u32 %v1298, 2147483648
    %v1420 = vxor.u32 %v1302, 2147483648
    %v1421 = vxor.u32 %v1304, 2147483648
    %v1422 = vxor.u32 %v1308, 2147483648
    %v1423 = vxor.u32 %v1310, 2147483648
    %v1424 = vxor.u32 %v1314, 2147483648
    %v1425 = vxor.u32 %v1316, 2147483648
    %v1426 = vxor.u32 %v1320, 2147483648
    %v1427 = vxor.u32 %v1322, 2147483648
    %v1428 = vxor.u32 %v1326, 2147483648
    %v1429 = vxor.u32 %v1328, 2147483648
    %v1430 = vxor.u32 %v1332, 2147483648
    %v1431 = vxor.u32 %v1334, 2147483648
    %v1432 = vxor.u32 %v1338, 2147483648
    %v1433 = vxor.u32 %v1340, 2147483648
    %v1434 = vxor.u32 %v1344, 2147483648
    %v1435 = vxor.u32 %v1346, 2147483648
    %v1436 = vxor.u32 %v1350, 2147483648
    %v1437 = vxor.u32 %v1352, 2147483648
    %v1438 = vxor.u32 %v1356, 2147483648
    %v1439 = vxor.u32 %v1358, 2147483648
    %v1440 = vxor.u32 %v1362, 2147483648
    %v1441 = vxor.u32 %v1364, 2147483648
    %v1442 = vxor.u32 %v1368, 2147483648
    %v1443 = vxor.u32 %v1370, 2147483648
    %v1444 = vxor.u32 %v1374, 2147483648
    %v1445 = vxor.u32 %v1376, 2147483648
    %v1446 = vxor.u32 %v1380, 2147483648
    %v1447 = vxor.u32 %v1382, 2147483648
    %v1448 = vmul.f32 %v1384, 1.442695
    %v1449 = vpow.pop %v1448
    %v1450 = vmul.f32 %v1385, 1.442695
    %v1451 = vpow.pop %v1450
    %v1452 = vmul.f32 %v1386, 1.442695
    %v1453 = vpow.pop %v1452
    %v1454 = vmul.f32 %v1387, 1.442695
    %v1455 = vpow.pop %v1454
    %v1456 = vmul.f32 %v1388, 1.442695
    %v1457 = vpow.pop %v1456
    %v1458 = vmul.f32 %v1389, 1.442695
    %v1459 = vpow.pop %v1458
    %v1460 = vmul.f32 %v1390, 1.442695
    %v1461 = vpow.pop %v1460
    %v1462 = vmul.f32 %v1391, 1.442695
    %v1463 = vpow.pop %v1462
    %v1464 = vmul.f32 %v1392, 1.442695
    %v1465 = vpow.pop %v1464
    %v1466 = vmul.f32 %v1393, 1.442695
    %v1467 = vpow.pop %v1466
    %v1468 = vmul.f32 %v1394, 1.442695
    %v1469 = vpow.pop %v1468
    %v1470 = vmul.f32 %v1395, 1.442695
    %v1471 = vpow.pop %v1470
    %v1472 = vmul.f32 %v1396, 1.442695
    %v1473 = vpow.pop %v1472
    %v1474 = vmul.f32 %v1397, 1.442695
    %v1475 = vpow.pop %v1474
    %v1476 = vmul.f32 %v1398, 1.442695
    %v1477 = vpow.pop %v1476
    %v1478 = vmul.f32 %v1399, 1.442695
    %v1479 = vpow.pop %v1478
    %v1480 = vmul.f32 %v1400, 1.442695
    %v1481 = vpow.pop %v1480
    %v1482 = vmul.f32 %v1401, 1.442695
    %v1483 = vpow.pop %v1482
    %v1484 = vmul.f32 %v1402, 1.442695
    %v1485 = vpow.pop %v1484
    %v1486 = vmul.f32 %v1403, 1.442695
    %v1487 = vpow.pop %v1486
    %v1488 = vmul.f32 %v1404, 1.442695
    %v1489 = vpow.pop %v1488
    %v1490 = vmul.f32 %v1405, 1.442695
    %v1491 = vpow.pop %v1490
    %v1492 = vmul.f32 %v1406, 1.442695
    %v1493 = vpow.pop %v1492
    %v1494 = vmul.f32 %v1407, 1.442695
    %v1495 = vpow.pop %v1494
    %v1496 = vmul.f32 %v1408, 1.442695
    %v1497 = vpow.pop %v1496
    %v1498 = vmul.f32 %v1409, 1.442695
    %v1499 = vpow.pop %v1498
    %v1500 = vmul.f32 %v1410, 1.442695
    %v1501 = vpow.pop %v1500
    %v1502 = vmul.f32 %v1411, 1.442695
    %v1503 = vpow.pop %v1502
    %v1504 = vmul.f32 %v1412, 1.442695
    %v1505 = vpow.pop %v1504
    %v1506 = vmul.f32 %v1413, 1.442695
    %v1507 = vpow.pop %v1506
    %v1508 = vmul.f32 %v1414, 1.442695
    %v1509 = vpow.pop %v1508
    %v1510 = vmul.f32 %v1415, 1.442695
    %v1511 = vpow.pop %v1510
    %v1512 = vmul.f32 %v1416, 1.442695
    %v1513 = vpow.pop %v1512
    %v1514 = vmul.f32 %v1417, 1.442695
    %v1515 = vpow.pop %v1514
    %v1516 = vmul.f32 %v1418, 1.442695
    %v1517 = vpow.pop %v1516
    %v1518 = vmul.f32 %v1419, 1.442695
    %v1519 = vpow.pop %v1518
    %v1520 = vmul.f32 %v1420, 1.442695
    %v1521 = vpow.pop %v1520
    %v1522 = vmul.f32 %v1421, 1.442695
    %v1523 = vpow.pop %v1522
    %v1524 = vmul.f32 %v1422, 1.442695
    %v1525 = vpow.pop %v1524
    %v1526 = vmul.f32 %v1423, 1.442695
    %v1527 = vpow.pop %v1526
    %v1528 = vmul.f32 %v1424, 1.442695
    %v1529 = vpow.pop %v1528
    %v1530 = vmul.f32 %v1425, 1.442695
    %v1531 = vpow.pop %v1530
    %v1532 = vmul.f32 %v1426, 1.442695
    %v1533 = vpow.pop %v1532
    %v1534 = vmul.f32 %v1427, 1.442695
    %v1535 = vpow.pop %v1534
    %v1536 = vmul.f32 %v1428, 1.442695
    %v1537 = vpow.pop %v1536
    %v1538 = vmul.f32 %v1429, 1.442695
    %v1539 = vpow.pop %v1538
    %v1540 = vmul.f32 %v1430, 1.442695
    %v1541 = vpow.pop %v1540
    %v1542 = vmul.f32 %v1431, 1.442695
    %v1543 = vpow.pop %v1542
    %v1544 = vmul.f32 %v1432, 1.442695
    %v1545 = vpow.pop %v1544
    %v1546 = vmul.f32 %v1433, 1.442695
    %v1547 = vpow.pop %v1546
    %v1548 = vmul.f32 %v1434, 1.442695
    %v1549 = vpow.pop %v1548
    %v1550 = vmul.f32 %v1435, 1.442695
    %v1551 = vpow.pop %v1550
    %v1552 = vmul.f32 %v1436, 1.442695
    %v1553 = vpow.pop %v1552
    %v1554 = vmul.f32 %v1437, 1.442695
    %v1555 = vpow.pop %v1554
    %v1556 = vmul.f32 %v1438, 1.442695
    %v1557 = vpow.pop %v1556
    %v1558 = vmul.f32 %v1439, 1.442695
    %v1559 = vpow.pop %v1558
    %v1560 = vmul.f32 %v1440, 1.442695
    %v1561 = vpow.pop %v1560
    %v1562 = vmul.f32 %v1441, 1.442695
    %v1563 = vpow.pop %v1562
    %v1564 = vmul.f32 %v1442, 1.442695
    %v1565 = vpow.pop %v1564
    %v1566 = vmul.f32 %v1443, 1.442695
    %v1567 = vpow.pop %v1566
    %v1568 = vmul.f32 %v1444, 1.442695
    %v1569 = vpow.pop %v1568
    %v1570 = vmul.f32 %v1445, 1.442695
    %v1571 = vpow.pop %v1570
    %v1572 = vmul.f32 %v1446, 1.442695
    %v1573 = vpow.pop %v1572
    %v1574 = vmul.f32 %v1447, 1.442695
    %v1575 = vpow.pop %v1574
    %v1576 = vadd.f32 %v1449, 1.0
    %v1577 = vadd.f32 %v1451, 1.0
    %v1578 = vadd.f32 %v1453, 1.0
    %v1579 = vadd.f32 %v1455, 1.0
    %v1580 = vadd.f32 %v1457, 1.0
    %v1581 = vadd.f32 %v1459, 1.0
    %v1582 = vadd.f32 %v1461, 1.0
    %v1583 = vadd.f32 %v1463, 1.0
    %v1584 = vadd.f32 %v1465, 1.0
    %v1585 = vadd.f32 %v1467, 1.0
    %v1586 = vadd.f32 %v1469, 1.0
    %v1587 = vadd.f32 %v1471, 1.0
    %v1588 = vadd.f32 %v1473, 1.0
    %v1589 = vadd.f32 %v1475, 1.0
    %v1590 = vadd.f32 %v1477, 1.0
    %v1591 = vadd.f32 %v1479, 1.0
    %v1592 = vadd.f32 %v1481, 1.0
    %v1593 = vadd.f32 %v1483, 1.0
    %v1594 = vadd.f32 %v1485, 1.0
    %v1595 = vadd.f32 %v1487, 1.0
    %v1596 = vadd.f32 %v1489, 1.0
    %v1597 = vadd.f32 %v1491, 1.0
    %v1598 = vadd.f32 %v1493, 1.0
    %v1599 = vadd.f32 %v1495, 1.0
    %v1600 = vadd.f32 %v1497, 1.0
    %v1601 = vadd.f32 %v1499, 1.0
    %v1602 = vadd.f32 %v1501, 1.0
    %v1603 = vadd.f32 %v1503, 1.0
    %v1604 = vadd.f32 %v1505, 1.0
    %v1605 = vadd.f32 %v1507, 1.0
    %v1606 = vadd.f32 %v1509, 1.0
    %v1607 = vadd.f32 %v1511, 1.0
    %v1608 = vadd.f32 %v1513, 1.0
    %v1609 = vadd.f32 %v1515, 1.0
    %v1610 = vadd.f32 %v1517, 1.0
    %v1611 = vadd.f32 %v1519, 1.0
    %v1612 = vadd.f32 %v1521, 1.0
    %v1613 = vadd.f32 %v1523, 1.0
    %v1614 = vadd.f32 %v1525, 1.0
    %v1615 = vadd.f32 %v1527, 1.0
    %v1616 = vadd.f32 %v1529, 1.0
    %v1617 = vadd.f32 %v1531, 1.0
    %v1618 = vadd.f32 %v1533, 1.0
    %v1619 = vadd.f32 %v1535, 1.0
    %v1620 = vadd.f32 %v1537, 1.0
    %v1621 = vadd.f32 %v1539, 1.0
    %v1622 = vadd.f32 %v1541, 1.0
    %v1623 = vadd.f32 %v1543, 1.0
    %v1624 = vadd.f32 %v1545, 1.0
    %v1625 = vadd.f32 %v1547, 1.0
    %v1626 = vadd.f32 %v1549, 1.0
    %v1627 = vadd.f32 %v1551, 1.0
    %v1628 = vadd.f32 %v1553, 1.0
    %v1629 = vadd.f32 %v1555, 1.0
    %v1630 = vadd.f32 %v1557, 1.0
    %v1631 = vadd.f32 %v1559, 1.0
    %v1632 = vadd.f32 %v1561, 1.0
    %v1633 = vadd.f32 %v1563, 1.0
    %v1634 = vadd.f32 %v1565, 1.0
    %v1635 = vadd.f32 %v1567, 1.0
    %v1636 = vadd.f32 %v1569, 1.0
    %v1637 = vadd.f32 %v1571, 1.0
    %v1638 = vadd.f32 %v1573, 1.0
    %v1639 = vadd.f32 %v1575, 1.0
    %v1640 = vrcp.pop %v1576
    %v1641 = vmul.f32 1.0, %v1640
    %v1642 = vrcp.pop %v1577
    %v1643 = vmul.f32 1.0, %v1642
    %v1644 = vrcp.pop %v1578
    %v1645 = vmul.f32 1.0, %v1644
    %v1646 = vrcp.pop %v1579
    %v1647 = vmul.f32 1.0, %v1646
    %v1648 = vrcp.pop %v1580
    %v1649 = vmul.f32 1.0, %v1648
    %v1650 = vrcp.pop %v1581
    %v1651 = vmul.f32 1.0, %v1650
    %v1652 = vrcp.pop %v1582
    %v1653 = vmul.f32 1.0, %v1652
    %v1654 = vrcp.pop %v1583
    %v1655 = vmul.f32 1.0, %v1654
    %v1656 = vrcp.pop %v1584
    %v1657 = vmul.f32 1.0, %v1656
    %v1658 = vrcp.pop %v1585
    %v1659 = vmul.f32 1.0, %v1658
    %v1660 = vrcp.pop %v1586
    %v1661 = vmul.f32 1.0, %v1660
    %v1662 = vrcp.pop %v1587
    %v1663 = vmul.f32 1.0, %v1662
    %v1664 = vrcp.pop %v1588
    %v1665 = vmul.f32 1.0, %v1664
    %v1666 = vrcp.pop %v1589
    %v1667 = vmul.f32 1.0, %v1666
    %v1668 = vrcp.pop %v1590
    %v1669 = vmul.f32 1.0, %v1668
    %v1670 = vrcp.pop %v1591
    %v1671 = vmul.f32 1.0, %v1670
    %v1672 = vrcp.pop %v1592
    %v1673 = vmul.f32 1.0, %v1672
    %v1674 = vrcp.pop %v1593
    %v1675 = vmul.f32 1.0, %v1674
    %v1676 = vrcp.pop %v1594
    %v1677 = vmul.f32 1.0, %v1676
    %v1678 = vrcp.pop %v1595
    %v1679 = vmul.f32 1.0, %v1678
    %v1680 = vrcp.pop %v1596
    %v1681 = vmul.f32 1.0, %v1680
    %v1682 = vrcp.pop %v1597
    %v1683 = vmul.f32 1.0, %v1682
    %v1684 = vrcp.pop %v1598
    %v1685 = vmul.f32 1.0, %v1684
    %v1686 = vrcp.pop %v1599
    %v1687 = vmul.f32 1.0, %v1686
    %v1688 = vrcp.pop %v1600
    %v1689 = vmul.f32 1.0, %v1688
    %v1690 = vrcp.pop %v1601
    %v1691 = vmul.f32 1.0, %v1690
    %v1692 = vrcp.pop %v1602
    %v1693 = vmul.f32 1.0, %v1692
    %v1694 = vrcp.pop %v1603
    %v1695 = vmul.f32 1.0, %v1694
    %v1696 = vrcp.pop %v1604
    %v1697 = vmul.f32 1.0, %v1696
    %v1698 = vrcp.pop %v1605
    %v1699 = vmul.f32 1.0, %v1698
    %v1700 = vrcp.pop %v1606
    %v1701 = vmul.f32 1.0, %v1700
    %v1702 = vrcp.pop %v1607
    %v1703 = vmul.f32 1.0, %v1702
    %v1704 = vrcp.pop %v1608
    %v1705 = vmul.f32 1.0, %v1704
    %v1706 = vrcp.pop %v1609
    %v1707 = vmul.f32 1.0, %v1706
    %v1708 = vrcp.pop %v1610
    %v1709 = vmul.f32 1.0, %v1708
    %v1710 = vrcp.pop %v1611
    %v1711 = vmul.f32 1.0, %v1710
    %v1712 = vrcp.pop %v1612
    %v1713 = vmul.f32 1.0, %v1712
    %v1714 = vrcp.pop %v1613
    %v1715 = vmul.f32 1.0, %v1714
    %v1716 = vrcp.pop %v1614
    %v1717 = vmul.f32 1.0, %v1716
    %v1718 = vrcp.pop %v1615
    %v1719 = vmul.f32 1.0, %v1718
    %v1720 = vrcp.pop %v1616
    %v1721 = vmul.f32 1.0, %v1720
    %v1722 = vrcp.pop %v1617
    %v1723 = vmul.f32 1.0, %v1722
    %v1724 = vrcp.pop %v1618
    %v1725 = vmul.f32 1.0, %v1724
    %v1726 = vrcp.pop %v1619
    %v1727 = vmul.f32 1.0, %v1726
    %v1728 = vrcp.pop %v1620
    %v1729 = vmul.f32 1.0, %v1728
    %v1730 = vrcp.pop %v1621
    %v1731 = vmul.f32 1.0, %v1730
    %v1732 = vrcp.pop %v1622
    %v1733 = vmul.f32 1.0, %v1732
    %v1734 = vrcp.pop %v1623
    %v1735 = vmul.f32 1.0, %v1734
    %v1736 = vrcp.pop %v1624
    %v1737 = vmul.f32 1.0, %v1736
    %v1738 = vrcp.pop %v1625
    %v1739 = vmul.f32 1.0, %v1738
    %v1740 = vrcp.pop %v1626
    %v1741 = vmul.f32 1.0, %v1740
    %v1742 = vrcp.pop %v1627
    %v1743 = vmul.f32 1.0, %v1742
    %v1744 = vrcp.pop %v1628
    %v1745 = vmul.f32 1.0, %v1744
    %v1746 = vrcp.pop %v1629
    %v1747 = vmul.f32 1.0, %v1746
    %v1748 = vrcp.pop %v1630
    %v1749 = vmul.f32 1.0, %v1748
    %v1750 = vrcp.pop %v1631
    %v1751 = vmul.f32 1.0, %v1750
    %v1752 = vrcp.pop %v1632
    %v1753 = vmul.f32 1.0, %v1752
    %v1754 = vrcp.pop %v1633
    %v1755 = vmul.f32 1.0, %v1754
    %v1756 = vrcp.pop %v1634
    %v1757 = vmul.f32 1.0, %v1756
    %v1758 = vrcp.pop %v1635
    %v1759 = vmul.f32 1.0, %v1758
    %v1760 = vrcp.pop %v1636
    %v1761 = vmul.f32 1.0, %v1760
    %v1762 = vrcp.pop %v1637
    %v1763 = vmul.f32 1.0, %v1762
    %v1764 = vrcp.pop %v1638
    %v1765 = vmul.f32 1.0, %v1764
    %v1766 = vrcp.pop %v1639
    %v1767 = vmul.f32 1.0, %v1766
    %1768 = vst [vmem:[#allocation8] sm:$0xff] %v1641
    %1769 = vst [vmem:[#allocation8 + $0x8] sm:$0xff] %v1643
    %1770 = vst [vmem:[#allocation8 + $0x10] sm:$0xff] %v1645
    %1771 = vst [vmem:[#allocation8 + $0x18] sm:$0xff] %v1647
    %1772 = vst [vmem:[#allocation8 + $0x20] sm:$0xff] %v1649
    %1773 = vst [vmem:[#allocation8 + $0x28] sm:$0xff] %v1651
    %1774 = vst [vmem:[#allocation8 + $0x30] sm:$0xff] %v1653
    %1775 = vst [vmem:[#allocation8 + $0x38] sm:$0xff] %v1655
    %1776 = vst [vmem:[#allocation8 + $0x40] sm:$0xff] %v1657
    %1777 = vst [vmem:[#allocation8 + $0x48] sm:$0xff] %v1659
    %1778 = vst [vmem:[#allocation8 + $0x50] sm:$0xff] %v1661
    %1779 = vst [vmem:[#allocation8 + $0x58] sm:$0xff] %v1663
    %1780 = vst [vmem:[#allocation8 + $0x60] sm:$0xff] %v1665
    %1781 = vst [vmem:[#allocation8 + $0x68] sm:$0xff] %v1667
    %1782 = vst [vmem:[#allocation8 + $0x70] sm:$0xff] %v1669
    %1783 = vst [vmem:[#allocation8 + $0x78] sm:$0xff] %v1671
    %1784 = vst [vmem:[#allocation8 + $0x80] sm:$0xff] %v1673
    %1785 = vst [vmem:[#allocation8 + $0x88] sm:$0xff] %v1675
    %1786 = vst [vmem:[#allocation8 + $0x90] sm:$0xff] %v1677
    %1787 = vst [vmem:[#allocation8 + $0x98] sm:$0xff] %v1679
    %1788 = vst [vmem:[#allocation8 + $0xa0] sm:$0xff] %v1681
    %1789 = vst [vmem:[#allocation8 + $0xa8] sm:$0xff] %v1683
    %1790 = vst [vmem:[#allocation8 + $0xb0] sm:$0xff] %v1685
    %1791 = vst [vmem:[#allocation8 + $0xb8] sm:$0xff] %v1687
    %1792 = vst [vmem:[#allocation8 + $0xc0] sm:$0xff] %v1689
    %1793 = vst [vmem:[#allocation8 + $0xc8] sm:$0xff] %v1691
    %1794 = vst [vmem:[#allocation8 + $0xd0] sm:$0xff] %v1693
    %1795 = vst [vmem:[#allocation8 + $0xd8] sm:$0xff] %v1695
    %1796 = vst [vmem:[#allocation8 + $0xe0] sm:$0xff] %v1697
    %1797 = vst [vmem:[#allocation8 + $0xe8] sm:$0xff] %v1699
    %1798 = vst [vmem:[#allocation8 + $0xf0] sm:$0xff] %v1701
    %1799 = vst [vmem:[#allocation8 + $0xf8] sm:$0xff] %v1703
    %1800 = vst [vmem:[#allocation8 + $0x100] sm:$0xff] %v1705
    %1801 = vst [vmem:[#allocation8 + $0x108] sm:$0xff] %v1707
    %1802 = vst [vmem:[#allocation8 + $0x110] sm:$0xff] %v1709
    %1803 = vst [vmem:[#allocation8 + $0x118] sm:$0xff] %v1711
    %1804 = vst [vmem:[#allocation8 + $0x120] sm:$0xff] %v1713
    %1805 = vst [vmem:[#allocation8 + $0x128] sm:$0xff] %v1715
    %1806 = vst [vmem:[#allocation8 + $0x130] sm:$0xff] %v1717
    %1807 = vst [vmem:[#allocation8 + $0x138] sm:$0xff] %v1719
    %1808 = vst [vmem:[#allocation8 + $0x140] sm:$0xff] %v1721
    %1809 = vst [vmem:[#allocation8 + $0x148] sm:$0xff] %v1723
    %1810 = vst [vmem:[#allocation8 + $0x150] sm:$0xff] %v1725
    %1811 = vst [vmem:[#allocation8 + $0x158] sm:$0xff] %v1727
    %1812 = vst [vmem:[#allocation8 + $0x160] sm:$0xff] %v1729
    %1813 = vst [vmem:[#allocation8 + $0x168] sm:$0xff] %v1731
    %1814 = vst [vmem:[#allocation8 + $0x170] sm:$0xff] %v1733
    %1815 = vst [vmem:[#allocation8 + $0x178] sm:$0xff] %v1735
    %1816 = vst [vmem:[#allocation8 + $0x180] sm:$0xff] %v1737
    %1817 = vst [vmem:[#allocation8 + $0x188] sm:$0xff] %v1739
    %1818 = vst [vmem:[#allocation8 + $0x190] sm:$0xff] %v1741
    %1819 = vst [vmem:[#allocation8 + $0x198] sm:$0xff] %v1743
    %1820 = vst [vmem:[#allocation8 + $0x1a0] sm:$0xff] %v1745
    %1821 = vst [vmem:[#allocation8 + $0x1a8] sm:$0xff] %v1747
    %1822 = vst [vmem:[#allocation8 + $0x1b0] sm:$0xff] %v1749
    %1823 = vst [vmem:[#allocation8 + $0x1b8] sm:$0xff] %v1751
    %1824 = vst [vmem:[#allocation8 + $0x1c0] sm:$0xff] %v1753
    %1825 = vst [vmem:[#allocation8 + $0x1c8] sm:$0xff] %v1755
    %1826 = vst [vmem:[#allocation8 + $0x1d0] sm:$0xff] %v1757
    %1827 = vst [vmem:[#allocation8 + $0x1d8] sm:$0xff] %v1759
    %1828 = vst [vmem:[#allocation8 + $0x1e0] sm:$0xff] %v1761
    %1829 = vst [vmem:[#allocation8 + $0x1e8] sm:$0xff] %v1763
    %1830 = vst [vmem:[#allocation8 + $0x1f0] sm:$0xff] %v1765
    %1831 = vst [vmem:[#allocation8 + $0x1f8] sm:$0xff] %v1767
    // Predicated region
    $region50: #{tpu_custom_call.1} parent=1 // pred_check
      _
    $region51: #{tpu_custom_call.1} parent=1 // pred_check_branch
      %1833 = sbr.rel (0) target = $region53
    $region52: #{tpu_custom_call.1} parent=1 // pred_region
      %s1835 = ssub.s32 8192, 8192
      %1836 = vsyncadd [#allocation4], %s1835
      %s1837 = sshll.u32 [#allocation8], 4
      %s1838 = int_to_ptr.vmem [resolvable:$true] %s1837
      %1843 = dma.vmem_to_hbm [thread:$0]  %s1838, 8192, %s9, [#allocation4], 256, 256, 16
    $region53: #{tpu_custom_call.1} parent=1 // pred_fallthru
      _
    // Predicated region
    $region54: #{tpu_custom_call.1} parent=1 // pred_check
      _
    $region55: #{tpu_custom_call.1} parent=1 // pred_check_branch
      %1845 = sbr.rel (0) target = $region57
    $region56: #{tpu_custom_call.1} parent=1 // pred_region
      %1846 = dma.done [#allocation4], 8192
    $region57: #{tpu_custom_call.1} parent=1 // pred_fallthru
      _
    %1847 = vsyncpa [#allocation3], 1
    %1848 = vsyncpa [#allocation6], 1
    %1849 = vsyncpa [#allocation4], 1

</llo_original>
